<compile_context>
chip_gen: v7x
topology: tpu7x:2x2x1
jax: 0.10.0
libtpu: 0.0.40
codegen_flags: <defaults>
</compile_context>

<pallas_src>
import functools

import jax
import jax.numpy as jnp
import numpy as np
from jax.experimental import pallas as pl
from jax.experimental.pallas import tpu as pltpu


# --------------------- Fused MaxPool + DoubleConv kernel (per batch element) ---------------------
def _downsample_kernel(x_ref, w1_ref, s1_ref, b1_ref, w2_ref, s2_ref, b2_ref,
                       o_ref, pad1_ref, pad2_ref, *, H, W):
    # x_ref:  (1, H, W, Cin)        input tile (one batch element), f32
    # w1_ref: (9*Cin, Cmid)  bf16   conv1 weights, taps row-major over (dy, dx, cin)
    # w2_ref: (9*Cmid, Cout) bf16   conv2 weights
    # s*_ref: (1, C)         f32    gamma / sqrt(running_var + eps)
    # b*_ref: (1, C)         f32    (conv_bias - running_mean) * scale + beta
    # pad*_ref: VMEM scratch for zero-padded (halo = 1) conv inputs
    Hp, Wp = H // 2, W // 2

    # ---- MaxPool2d(2) — stays in VMEM ----
    x = x_ref[0]                                             # (H, W, Cin)
    Cin = x.shape[-1]
    x = jnp.max(x.reshape(Hp, 2, W, Cin), axis=1)            # pool along H
    pooled = jnp.max(x.reshape(Hp, Wp, 2, Cin), axis=2)      # pool along W -> (Hp, Wp, Cin)

    # ---- in-kernel zero padding (halo = 1) into VMEM scratch ----
    pad1_ref[...] = jnp.zeros_like(pad1_ref)
    pad1_ref[1:Hp + 1, 1:Wp + 1, :] = pooled

    def im2col(pad_ref):
        # Build one (Hp*Wp, 9*C) patch matrix from 9 shifted slabs; cast to bf16 for the MXU.
        C = pad_ref.shape[-1]
        slabs = [pad_ref[dy:dy + Hp, dx:dx + Wp, :].reshape(Hp * Wp, C)
                 for dy in range(3) for dx in range(3)]
        return jnp.concatenate(slabs, axis=-1).astype(jnp.bfloat16)

    # ---- Conv1 (single MXU matmul, K = 9*Cin) + folded BN + ReLU (f32 epilogue) ----
    patch1 = im2col(pad1_ref)                                             # (Hp*Wp, 9*Cin) bf16
    y1 = jnp.dot(patch1, w1_ref[...], preferred_element_type=jnp.float32)  # (Hp*Wp, Cmid) f32
    y1 = jnp.maximum(y1 * s1_ref[...] + b1_ref[...], 0.0)                 # Dropout = identity (eval)
    Cmid = y1.shape[-1]

    # ---- pad conv1 activations for conv2 ----
    pad2_ref[...] = jnp.zeros_like(pad2_ref)
    pad2_ref[1:Hp + 1, 1:Wp + 1, :] = y1.reshape(Hp, Wp, Cmid)

    # ---- Conv2 (single MXU matmul, K = 9*Cmid) + folded BN + ReLU ----
    patch2 = im2col(pad2_ref)                                             # (Hp*Wp, 9*Cmid) bf16
    y2 = jnp.dot(patch2, w2_ref[...], preferred_element_type=jnp.float32)  # (Hp*Wp, Cout) f32
    y2 = jnp.maximum(y2 * s2_ref[...] + b2_ref[...], 0.0)
    Cout = y2.shape[-1]

    o_ref[0] = y2.reshape(Hp, Wp, Cout).astype(o_ref.dtype)


def downsample_pallas(x_nhwc, params):
    """Fused MaxPool2d(2) -> (Conv3x3 -> BN -> Dropout(eval) -> ReLU) x 2 on NHWC input."""
    (w1, s1, b1), (w2, s2, b2) = params
    N, H, W, Cin = x_nhwc.shape
    assert H % 2 == 0 and W % 2 == 0, "even spatial dims expected (MaxPool2d(2))"
    Cmid, Cout = w1.shape[1], w2.shape[1]
    Hp, Wp = H // 2, W // 2

    kern = functools.partial(_downsample_kernel, H=H, W=W)
    return pl.pallas_call(
        kern,
        out_shape=jax.ShapeDtypeStruct((N, Hp, Wp, Cout), x_nhwc.dtype),
        grid=(N,),
        in_specs=[
            pl.BlockSpec((1, H, W, Cin), lambda n: (n, 0, 0, 0)),
            pl.BlockSpec((9 * Cin, Cmid), lambda n: (0, 0)),
            pl.BlockSpec((1, Cmid), lambda n: (0, 0)),
            pl.BlockSpec((1, Cmid), lambda n: (0, 0)),
            pl.BlockSpec((9 * Cmid, Cout), lambda n: (0, 0)),
            pl.BlockSpec((1, Cout), lambda n: (0, 0)),
            pl.BlockSpec((1, Cout), lambda n: (0, 0)),
        ],
        out_specs=pl.BlockSpec((1, Hp, Wp, Cout), lambda n: (n, 0, 0, 0)),
        scratch_shapes=[
            pltpu.VMEM((Hp + 2, Wp + 2, Cin), jnp.float32),    # padded pooled input
            pltpu.VMEM((Hp + 2, Wp + 2, Cmid), jnp.float32),   # padded conv1 activations
        ],
        compiler_params=pltpu.CompilerParams(
            dimension_semantics=("parallel",)),                # feeds both TCs on v7x
    )(x_nhwc,
      w1.astype(jnp.bfloat16), s1.reshape(1, Cmid), b1.reshape(1, Cmid),
      w2.astype(jnp.bfloat16), s2.reshape(1, Cout), b2.reshape(1, Cout))


# ------------------------------------ DownSample module ------------------------------------
def init_downsample_params(key, in_channels, out_channels, eps=1e-5):
    """Deterministic synthetic parameters for MaxPool -> DoubleConv(in, out)."""
    mid_channels = out_channels
    params = []
    cins = [in_channels, mid_channels]
    couts = [mid_channels, out_channels]
    for cin, cout in zip(cins, couts):
        key, kw, kb, kg, kbe, km, kv = jax.random.split(key, 7)
        # PyTorch Conv2d weight is OIHW (cout, cin, 3, 3) -> store as (9*cin, cout),
        # rows ordered (dy, dx, cin) to match the in-kernel im2col patch layout.
        w_oihw = 0.1 * jax.random.normal(kw, (cout, cin, 3, 3), jnp.float32)
        w2d = jnp.transpose(w_oihw, (2, 3, 1, 0)).reshape(9 * cin, cout)
        b = 0.1 * jax.random.normal(kb, (cout,), jnp.float32)
        gamma = jax.random.uniform(kg, (cout,), jnp.float32, 0.5, 1.5)
        beta = 0.1 * jax.random.normal(kbe, (cout,), jnp.float32)
        r_mean = 0.1 * jax.random.normal(km, (cout,), jnp.float32)
        r_var = jax.random.uniform(kv, (cout,), jnp.float32, 0.5, 1.5)
        scale = gamma / jnp.sqrt(r_var + eps)
        shift = (b - r_mean) * scale + beta
        params.append((w2d, scale, shift))
    return params


def downsample_forward(x_nchw, params):
    """DownSample forward (inference). NCHW in/out (PyTorch convention)."""
    x = jnp.transpose(x_nchw, (0, 2, 3, 1))          # NCHW -> NHWC (channels on lanes)
    y = downsample_pallas(x, params)
    return jnp.transpose(y, (0, 3, 1, 2))            # NHWC -> NCHW


# ------------------------------------ Pure-JAX reference ------------------------------------
def downsample_reference(x_nchw, params):
    x = jnp.transpose(x_nchw, (0, 2, 3, 1))
    x = jax.lax.reduce_window(x, -jnp.inf, jax.lax.max,
                              (1, 2, 2, 1), (1, 2, 2, 1), "VALID")
    for (w2d, scale, shift) in params:
        cout = w2d.shape[1]
        cin = w2d.shape[0] // 9
        w_hwio = w2d.reshape(3, 3, cin, cout)
        y = jax.lax.conv_general_dilated(
            x, w_hwio, window_strides=(1, 1), padding="SAME",
            dimension_numbers=("NHWC", "HWIO", "NHWC"),
            precision=jax.lax.Precision.HIGHEST)
        x = jnp.maximum(y * scale + shift, 0.0)
    return jnp.transpose(x, (0, 3, 1, 2))


if __name__ == "__main__":
    key = jax.random.PRNGKey(0)
    k_x, k_p = jax.random.split(key)

    N, Cin, H, W = 2, 4, 16, 16
    Cout = 8
    x = jax.random.normal(k_x, (N, Cin, H, W), jnp.float32)

    params = init_downsample_params(k_p, Cin, Cout)

    out = jax.block_until_ready(downsample_forward(x, params))
    ref = jax.block_until_ready(downsample_reference(x, params))

    assert out.shape == (N, Cout, H // 2, W // 2), out.shape
    # Tolerance accounts for bf16 MXU operands (f32 accumulation) vs f32-HIGHEST reference.
    np.testing.assert_allclose(np.asarray(out), np.asarray(ref), rtol=3e-2, atol=3e-2)

    print("KERNEL_OK")
</pallas_src>

<mosaic_0001>
module attributes {stable_mosaic.version = 11 : i64} {
  func.func @_downsample_kernel(%arg0: i32, %arg1: memref<1x16x16x4xf32, #tpu.memory_space<vmem>>, %arg2: memref<36x8xbf16, #tpu.memory_space<vmem>>, %arg3: memref<1x8xf32, #tpu.memory_space<vmem>>, %arg4: memref<1x8xf32, #tpu.memory_space<vmem>>, %arg5: memref<72x8xbf16, #tpu.memory_space<vmem>>, %arg6: memref<1x8xf32, #tpu.memory_space<vmem>>, %arg7: memref<1x8xf32, #tpu.memory_space<vmem>>, %arg8: memref<1x8x8x8xf32, #tpu.memory_space<vmem>>, %arg9: memref<10x10x4xf32, #tpu.memory_space<vmem>>, %arg10: memref<10x10x8xf32, #tpu.memory_space<vmem>>) attributes {dimension_semantics = [#tpu.dimension_semantics<parallel>], iteration_bounds = array<i64: 2>, scalar_prefetch = 0 : i64, scratch_operands = 2 : i64, tpu.core_type = #tpu.core_type<tc>, window_params = [{transform_indices = @transform_0, window_bounds = array<i64: 1, 16, 16, 4>}, {pipeline_mode = #tpu.pipeline_mode<synchronous>, transform_indices = @transform_1, window_bounds = array<i64: 36, 8>}, {pipeline_mode = #tpu.pipeline_mode<synchronous>, transform_indices = @transform_2, window_bounds = array<i64: 1, 8>}, {pipeline_mode = #tpu.pipeline_mode<synchronous>, transform_indices = @transform_3, window_bounds = array<i64: 1, 8>}, {pipeline_mode = #tpu.pipeline_mode<synchronous>, transform_indices = @transform_4, window_bounds = array<i64: 72, 8>}, {pipeline_mode = #tpu.pipeline_mode<synchronous>, transform_indices = @transform_5, window_bounds = array<i64: 1, 8>}, {pipeline_mode = #tpu.pipeline_mode<synchronous>, transform_indices = @transform_6, window_bounds = array<i64: 1, 8>}, {transform_indices = @transform_7, window_bounds = array<i64: 1, 8, 8, 8>}]} {
    %c0 = arith.constant 0 : index
    %c0_0 = arith.constant 0 : index
    %c0_1 = arith.constant 0 : index
    %c0_2 = arith.constant 0 : index
    %0 = vector.load %arg1[%c0, %c0_0, %c0_1, %c0_2] : memref<1x16x16x4xf32, #tpu.memory_space<vmem>>, vector<1x16x16x4xf32>
    %1 = vector.shape_cast %0 : vector<1x16x16x4xf32> to vector<16x16x4xf32>
    %2 = vector.shape_cast %1 : vector<16x16x4xf32> to vector<8x2x16x4xf32>
    %cst = arith.constant dense<0xFF800000> : vector<8x16x4xf32>
    %3 = vector.multi_reduction <maximumf>, %2, %cst [1] : vector<8x2x16x4xf32> to vector<8x16x4xf32>
    %4 = vector.shape_cast %3 : vector<8x16x4xf32> to vector<8x8x2x4xf32>
    %cst_3 = arith.constant dense<0xFF800000> : vector<8x8x4xf32>
    %5 = vector.multi_reduction <maximumf>, %4, %cst_3 [2] : vector<8x8x2x4xf32> to vector<8x8x4xf32>
    %cst_4 = arith.constant 0.000000e+00 : f32
    %6 = vector.broadcast %cst_4 : f32 to vector<10x10x4xf32>
    %c0_5 = arith.constant 0 : index
    %c0_6 = arith.constant 0 : index
    %c0_7 = arith.constant 0 : index
    %7 = vector.load %arg9[%c0_5, %c0_6, %c0_7] : memref<10x10x4xf32, #tpu.memory_space<vmem>>, vector<10x10x4xf32>
    tpu.vector_store %arg9[%c0_5, %c0_6, %c0_7], %6 {strides = array<i32>} : memref<10x10x4xf32, #tpu.memory_space<vmem>>, vector<10x10x4xf32>,
    %c1 = arith.constant 1 : index
    %c1_8 = arith.constant 1 : index
    %c0_9 = arith.constant 0 : index
    %8 = vector.load %arg9[%c1, %c1_8, %c0_9] : memref<10x10x4xf32, #tpu.memory_space<vmem>>, vector<8x8x4xf32>
    tpu.vector_store %arg9[%c1, %c1_8, %c0_9], %5 {strides = array<i32>} : memref<10x10x4xf32, #tpu.memory_space<vmem>>, vector<8x8x4xf32>,
    %c0_10 = arith.constant 0 : index
    %c0_11 = arith.constant 0 : index
    %c0_12 = arith.constant 0 : index
    %9 = vector.load %arg9[%c0_10, %c0_11, %c0_12] : memref<10x10x4xf32, #tpu.memory_space<vmem>>, vector<8x8x4xf32>
    %10 = vector.shape_cast %9 : vector<8x8x4xf32> to vector<64x4xf32>
    %c0_13 = arith.constant 0 : index
    %c1_14 = arith.constant 1 : index
    %c0_15 = arith.constant 0 : index
    %11 = vector.load %arg9[%c0_13, %c1_14, %c0_15] : memref<10x10x4xf32, #tpu.memory_space<vmem>>, vector<8x8x4xf32>
    %12 = vector.shape_cast %11 : vector<8x8x4xf32> to vector<64x4xf32>
    %c0_16 = arith.constant 0 : index
    %c2 = arith.constant 2 : index
    %c0_17 = arith.constant 0 : index
    %13 = vector.load %arg9[%c0_16, %c2, %c0_17] : memref<10x10x4xf32, #tpu.memory_space<vmem>>, vector<8x8x4xf32>
    %14 = vector.shape_cast %13 : vector<8x8x4xf32> to vector<64x4xf32>
    %c1_18 = arith.constant 1 : index
    %c0_19 = arith.constant 0 : index
    %c0_20 = arith.constant 0 : index
    %15 = vector.load %arg9[%c1_18, %c0_19, %c0_20] : memref<10x10x4xf32, #tpu.memory_space<vmem>>, vector<8x8x4xf32>
    %16 = vector.shape_cast %15 : vector<8x8x4xf32> to vector<64x4xf32>
    %c1_21 = arith.constant 1 : index
    %c1_22 = arith.constant 1 : index
    %c0_23 = arith.constant 0 : index
    %17 = vector.load %arg9[%c1_21, %c1_22, %c0_23] : memref<10x10x4xf32, #tpu.memory_space<vmem>>, vector<8x8x4xf32>
    %18 = vector.shape_cast %17 : vector<8x8x4xf32> to vector<64x4xf32>
    %c1_24 = arith.constant 1 : index
    %c2_25 = arith.constant 2 : index
    %c0_26 = arith.constant 0 : index
    %19 = vector.load %arg9[%c1_24, %c2_25, %c0_26] : memref<10x10x4xf32, #tpu.memory_space<vmem>>, vector<8x8x4xf32>
    %20 = vector.shape_cast %19 : vector<8x8x4xf32> to vector<64x4xf32>
    %c2_27 = arith.constant 2 : index
    %c0_28 = arith.constant 0 : index
    %c0_29 = arith.constant 0 : index
    %21 = vector.load %arg9[%c2_27, %c0_28, %c0_29] : memref<10x10x4xf32, #tpu.memory_space<vmem>>, vector<8x8x4xf32>
    %22 = vector.shape_cast %21 : vector<8x8x4xf32> to vector<64x4xf32>
    %c2_30 = arith.constant 2 : index
    %c1_31 = arith.constant 1 : index
    %c0_32 = arith.constant 0 : index
    %23 = vector.load %arg9[%c2_30, %c1_31, %c0_32] : memref<10x10x4xf32, #tpu.memory_space<vmem>>, vector<8x8x4xf32>
    %24 = vector.shape_cast %23 : vector<8x8x4xf32> to vector<64x4xf32>
    %c2_33 = arith.constant 2 : index
    %c2_34 = arith.constant 2 : index
    %c0_35 = arith.constant 0 : index
    %25 = vector.load %arg9[%c2_33, %c2_34, %c0_35] : memref<10x10x4xf32, #tpu.memory_space<vmem>>, vector<8x8x4xf32>
    %26 = vector.shape_cast %25 : vector<8x8x4xf32> to vector<64x4xf32>
    %27 = tpu.concatenate %10, %12, %14, %16, %18, %20, %22, %24, %26 in 1 : vector<64x4xf32>, vector<64x4xf32>, vector<64x4xf32>, vector<64x4xf32>, vector<64x4xf32>, vector<64x4xf32>, vector<64x4xf32>, vector<64x4xf32>, vector<64x4xf32> -> vector<64x36xf32>
    %28 = arith.truncf %27 : vector<64x36xf32> to vector<64x36xbf16>
    %c0_36 = arith.constant 0 : index
    %c0_37 = arith.constant 0 : index
    %29 = vector.load %arg2[%c0_36, %c0_37] : memref<36x8xbf16, #tpu.memory_space<vmem>>, vector<36x8xbf16>
    %cst_38 = arith.constant dense<0.000000e+00> : vector<64x8xf32>
    %30 = tpu.matmul %28, %29, %cst_38 {dimension_numbers = #tpu.dot_dimension_numbers<[1], [0], [0], [1], [0, 0, 1, 1], [], []>} : vector<64x36xbf16>, vector<36x8xbf16>, vector<64x8xf32> -> vector<64x8xf32>
    %c0_39 = arith.constant 0 : index
    %c0_40 = arith.constant 0 : index
    %31 = vector.load %arg3[%c0_39, %c0_40] : memref<1x8xf32, #tpu.memory_space<vmem>>, vector<1x8xf32>
    %32 = vector.broadcast %31 : vector<1x8xf32> to vector<64x8xf32>
    %33 = arith.mulf %30, %32 : vector<64x8xf32>
    %c0_41 = arith.constant 0 : index
    %c0_42 = arith.constant 0 : index
    %34 = vector.load %arg4[%c0_41, %c0_42] : memref<1x8xf32, #tpu.memory_space<vmem>>, vector<1x8xf32>
    %35 = vector.broadcast %34 : vector<1x8xf32> to vector<64x8xf32>
    %36 = arith.addf %33, %35 : vector<64x8xf32>
    %cst_43 = arith.constant 0.000000e+00 : f32
    %37 = vector.broadcast %cst_43 : f32 to vector<64x8xf32>
    %38 = arith.maximumf %36, %37 : vector<64x8xf32>
    %cst_44 = arith.constant 0.000000e+00 : f32
    %39 = vector.broadcast %cst_44 : f32 to vector<10x10x8xf32>
    %c0_45 = arith.constant 0 : index
    %c0_46 = arith.constant 0 : index
    %c0_47 = arith.constant 0 : index
    %40 = vector.load %arg10[%c0_45, %c0_46, %c0_47] : memref<10x10x8xf32, #tpu.memory_space<vmem>>, vector<10x10x8xf32>
    tpu.vector_store %arg10[%c0_45, %c0_46, %c0_47], %39 {strides = array<i32>} : memref<10x10x8xf32, #tpu.memory_space<vmem>>, vector<10x10x8xf32>,
    %41 = vector.shape_cast %38 : vector<64x8xf32> to vector<8x8x8xf32>
    %c1_48 = arith.constant 1 : index
    %c1_49 = arith.constant 1 : index
    %c0_50 = arith.constant 0 : index
    %42 = vector.load %arg10[%c1_48, %c1_49, %c0_50] : memref<10x10x8xf32, #tpu.memory_space<vmem>>, vector<8x8x8xf32>
    tpu.vector_store %arg10[%c1_48, %c1_49, %c0_50], %41 {strides = array<i32>} : memref<10x10x8xf32, #tpu.memory_space<vmem>>, vector<8x8x8xf32>,
    %c0_51 = arith.constant 0 : index
    %c0_52 = arith.constant 0 : index
    %c0_53 = arith.constant 0 : index
    %43 = vector.load %arg10[%c0_51, %c0_52, %c0_53] : memref<10x10x8xf32, #tpu.memory_space<vmem>>, vector<8x8x8xf32>
    %44 = vector.shape_cast %43 : vector<8x8x8xf32> to vector<64x8xf32>
    %c0_54 = arith.constant 0 : index
    %c1_55 = arith.constant 1 : index
    %c0_56 = arith.constant 0 : index
    %45 = vector.load %arg10[%c0_54, %c1_55, %c0_56] : memref<10x10x8xf32, #tpu.memory_space<vmem>>, vector<8x8x8xf32>
    %46 = vector.shape_cast %45 : vector<8x8x8xf32> to vector<64x8xf32>
    %c0_57 = arith.constant 0 : index
    %c2_58 = arith.constant 2 : index
    %c0_59 = arith.constant 0 : index
    %47 = vector.load %arg10[%c0_57, %c2_58, %c0_59] : memref<10x10x8xf32, #tpu.memory_space<vmem>>, vector<8x8x8xf32>
    %48 = vector.shape_cast %47 : vector<8x8x8xf32> to vector<64x8xf32>
    %c1_60 = arith.constant 1 : index
    %c0_61 = arith.constant 0 : index
    %c0_62 = arith.constant 0 : index
    %49 = vector.load %arg10[%c1_60, %c0_61, %c0_62] : memref<10x10x8xf32, #tpu.memory_space<vmem>>, vector<8x8x8xf32>
    %50 = vector.shape_cast %49 : vector<8x8x8xf32> to vector<64x8xf32>
    %c1_63 = arith.constant 1 : index
    %c1_64 = arith.constant 1 : index
    %c0_65 = arith.constant 0 : index
    %51 = vector.load %arg10[%c1_63, %c1_64, %c0_65] : memref<10x10x8xf32, #tpu.memory_space<vmem>>, vector<8x8x8xf32>
    %52 = vector.shape_cast %51 : vector<8x8x8xf32> to vector<64x8xf32>
    %c1_66 = arith.constant 1 : index
    %c2_67 = arith.constant 2 : index
    %c0_68 = arith.constant 0 : index
    %53 = vector.load %arg10[%c1_66, %c2_67, %c0_68] : memref<10x10x8xf32, #tpu.memory_space<vmem>>, vector<8x8x8xf32>
    %54 = vector.shape_cast %53 : vector<8x8x8xf32> to vector<64x8xf32>
    %c2_69 = arith.constant 2 : index
    %c0_70 = arith.constant 0 : index
    %c0_71 = arith.constant 0 : index
    %55 = vector.load %arg10[%c2_69, %c0_70, %c0_71] : memref<10x10x8xf32, #tpu.memory_space<vmem>>, vector<8x8x8xf32>
    %56 = vector.shape_cast %55 : vector<8x8x8xf32> to vector<64x8xf32>
    %c2_72 = arith.constant 2 : index
    %c1_73 = arith.constant 1 : index
    %c0_74 = arith.constant 0 : index
    %57 = vector.load %arg10[%c2_72, %c1_73, %c0_74] : memref<10x10x8xf32, #tpu.memory_space<vmem>>, vector<8x8x8xf32>
    %58 = vector.shape_cast %57 : vector<8x8x8xf32> to vector<64x8xf32>
    %c2_75 = arith.constant 2 : index
    %c2_76 = arith.constant 2 : index
    %c0_77 = arith.constant 0 : index
    %59 = vector.load %arg10[%c2_75, %c2_76, %c0_77] : memref<10x10x8xf32, #tpu.memory_space<vmem>>, vector<8x8x8xf32>
    %60 = vector.shape_cast %59 : vector<8x8x8xf32> to vector<64x8xf32>
    %61 = tpu.concatenate %44, %46, %48, %50, %52, %54, %56, %58, %60 in 1 : vector<64x8xf32>, vector<64x8xf32>, vector<64x8xf32>, vector<64x8xf32>, vector<64x8xf32>, vector<64x8xf32>, vector<64x8xf32>, vector<64x8xf32>, vector<64x8xf32> -> vector<64x72xf32>
    %62 = arith.truncf %61 : vector<64x72xf32> to vector<64x72xbf16>
    %c0_78 = arith.constant 0 : index
    %c0_79 = arith.constant 0 : index
    %63 = vector.load %arg5[%c0_78, %c0_79] : memref<72x8xbf16, #tpu.memory_space<vmem>>, vector<72x8xbf16>
    %cst_80 = arith.constant dense<0.000000e+00> : vector<64x8xf32>
    %64 = tpu.matmul %62, %63, %cst_80 {dimension_numbers = #tpu.dot_dimension_numbers<[1], [0], [0], [1], [0, 0, 1, 1], [], []>} : vector<64x72xbf16>, vector<72x8xbf16>, vector<64x8xf32> -> vector<64x8xf32>
    %c0_81 = arith.constant 0 : index
    %c0_82 = arith.constant 0 : index
    %65 = vector.load %arg6[%c0_81, %c0_82] : memref<1x8xf32, #tpu.memory_space<vmem>>, vector<1x8xf32>
    %66 = vector.broadcast %65 : vector<1x8xf32> to vector<64x8xf32>
    %67 = arith.mulf %64, %66 : vector<64x8xf32>
    %c0_83 = arith.constant 0 : index
    %c0_84 = arith.constant 0 : index
    %68 = vector.load %arg7[%c0_83, %c0_84] : memref<1x8xf32, #tpu.memory_space<vmem>>, vector<1x8xf32>
    %69 = vector.broadcast %68 : vector<1x8xf32> to vector<64x8xf32>
    %70 = arith.addf %67, %69 : vector<64x8xf32>
    %cst_85 = arith.constant 0.000000e+00 : f32
    %71 = vector.broadcast %cst_85 : f32 to vector<64x8xf32>
    %72 = arith.maximumf %70, %71 : vector<64x8xf32>
    %73 = vector.shape_cast %72 : vector<64x8xf32> to vector<8x8x8xf32>
    %c0_86 = arith.constant 0 : index
    %c0_87 = arith.constant 0 : index
    %c0_88 = arith.constant 0 : index
    %c0_89 = arith.constant 0 : index
    %74 = vector.load %arg8[%c0_86, %c0_87, %c0_88, %c0_89] : memref<1x8x8x8xf32, #tpu.memory_space<vmem>>, vector<1x8x8x8xf32>
    %75 = vector.shape_cast %74 : vector<1x8x8x8xf32> to vector<8x8x8xf32>
    %76 = vector.shape_cast %73 : vector<8x8x8xf32> to vector<1x8x8x8xf32>
    tpu.vector_store %arg8[%c0_86, %c0_87, %c0_88, %c0_89], %76 {strides = array<i32>} : memref<1x8x8x8xf32, #tpu.memory_space<vmem>>, vector<1x8x8x8xf32>,
    return
  }
  func.func @transform_0(%arg0: i32) -> (i32, i32, i32, i32) {
    %c0_i32 = arith.constant 0 : i32
    %c0_i32_0 = arith.constant 0 : i32
    %c0_i32_1 = arith.constant 0 : i32
    %c0_i32_2 = arith.constant 0 : i32
    return %arg0, %c0_i32, %c0_i32_0, %c0_i32_1 : i32, i32, i32, i32
  }
  func.func @transform_1(%arg0: i32) -> (i32, i32) {
    %c0_i32 = arith.constant 0 : i32
    %c0_i32_0 = arith.constant 0 : i32
    %c0_i32_1 = arith.constant 0 : i32
    return %c0_i32, %c0_i32_0 : i32, i32
  }
  func.func @transform_2(%arg0: i32) -> (i32, i32) {
    %c0_i32 = arith.constant 0 : i32
    %c0_i32_0 = arith.constant 0 : i32
    %c0_i32_1 = arith.constant 0 : i32
    return %c0_i32, %c0_i32_0 : i32, i32
  }
  func.func @transform_3(%arg0: i32) -> (i32, i32) {
    %c0_i32 = arith.constant 0 : i32
    %c0_i32_0 = arith.constant 0 : i32
    %c0_i32_1 = arith.constant 0 : i32
    return %c0_i32, %c0_i32_0 : i32, i32
  }
  func.func @transform_4(%arg0: i32) -> (i32, i32) {
    %c0_i32 = arith.constant 0 : i32
    %c0_i32_0 = arith.constant 0 : i32
    %c0_i32_1 = arith.constant 0 : i32
    return %c0_i32, %c0_i32_0 : i32, i32
  }
  func.func @transform_5(%arg0: i32) -> (i32, i32) {
    %c0_i32 = arith.constant 0 : i32
    %c0_i32_0 = arith.constant 0 : i32
    %c0_i32_1 = arith.constant 0 : i32
    return %c0_i32, %c0_i32_0 : i32, i32
  }
  func.func @transform_6(%arg0: i32) -> (i32, i32) {
    %c0_i32 = arith.constant 0 : i32
    %c0_i32_0 = arith.constant 0 : i32
    %c0_i32_1 = arith.constant 0 : i32
    return %c0_i32, %c0_i32_0 : i32, i32
  }
  func.func @transform_7(%arg0: i32) -> (i32, i32, i32, i32) {
    %c0_i32 = arith.constant 0 : i32
    %c0_i32_0 = arith.constant 0 : i32
    %c0_i32_1 = arith.constant 0 : i32
    %c0_i32_2 = arith.constant 0 : i32
    return %arg0, %c0_i32, %c0_i32_0, %c0_i32_1 : i32, i32, i32, i32
  }
}

</mosaic_0001>

<llo_original>
// kernel: tpu_custom_call.1
$region0: #{tpu_custom_call.1}
  #allocation0 [shape = 'u32[]', space=smem, size = 0x4, offset = 0x4, fixed_abs, tag = 'smem constant byte address 0x4 - core index']
  #allocation1 [shape = 'u32[144,128]{1,0:T(1,128)}', space=vmem, size = 0x12000, scoped, tag = 'internal scratch']
  #allocation2 [shape = 'f32[10,10,4]{2,1,0:T(8,128)}', space=vmem, size = 0x14000, scoped, tag = 'scratch operand']
  #allocation3 [shape = 'f32[10,10,8]{2,1,0:T(8,128)}', space=vmem, size = 0x14000, scoped, tag = 'scratch operand']
  %s0 = inlined_call_operand.vmem [shape: f32[2,16,16,4], index: 0, kind: input, shape index: {}]
  %s1 = inlined_call_operand.vmem [shape: bf16[36,8], index: 1, kind: input, shape index: {}]
  %s2 = inlined_call_operand.vmem [shape: f32[1,8], index: 2, kind: input, shape index: {}]
  %s3 = inlined_call_operand.vmem [shape: f32[1,8], index: 3, kind: input, shape index: {}]
  %s4 = inlined_call_operand.vmem [shape: bf16[72,8], index: 4, kind: input, shape index: {}]
  %s5 = inlined_call_operand.vmem [shape: f32[1,8], index: 5, kind: input, shape index: {}]
  %s6 = inlined_call_operand.vmem [shape: f32[1,8], index: 6, kind: input, shape index: {}]
  %s7 = inlined_call_operand.hbm [shape: f32[2,8,8,8], index: 7, kind: output, shape index: {}]
  %s8 = sld [smem:[#allocation0]]
  $region61: #{tpu_custom_call.1} parent=0
    _
  %s10 = ssub.s32 1, %s8
  %s11 = scalar_select 0, %s10, %s8
  $region1: #{tpu_custom_call.1} parent=0
    #allocation4 [shape = 'u8[65536]{0}', space=vmem, size = 0x10000, scoped, tag = 'output window, operand 0']
    #allocation5 [shape = 's32[2]{0}', space=sflag, size = 0x8, scoped, tag = 'scoped memory for tpu_custom_call.1']
    %12 = vsyncpa [#allocation5], 0
    %s13 = scalar_lea.sflag [#allocation5], 1
    %14 = vsyncpa %s13, 0
    loop: start=0, step=1, limit=4
    $region2: #{tpu_custom_call.1} parent=1 // loop_pre_header
      _
    $region3: #{tpu_custom_call.1} parent=1 // loop_header
      %s16 = sphi 0, %s20
      %p17 = scmp.ge.s32.totalorder %s16, 4
      %s26 = sphi 0, %s28
      %s29 = sphi 0, %s26
      %s30 = sphi 0, %s29
      %s46 = sphi 0, %s30
      %s50 = sphi 0, %s50
      %s52 = sphi 0, %s50
      %s53 = sphi 0, %s52
      %s67 = sphi 0, %s53
      %s71 = sphi 0, %s71
      %s73 = sphi 0, %s71
      %s74 = sphi 0, %s73
      %s88 = sphi 0, %s74
      %s92 = sphi 0, %s92
      %s94 = sphi 0, %s92
      %s95 = sphi 0, %s94
      %s109 = sphi 0, %s95
      %s113 = sphi 0, %s113
      %s115 = sphi 0, %s113
      %s116 = sphi 0, %s115
      %s130 = sphi 0, %s116
      %s134 = sphi 0, %s134
      %s136 = sphi 0, %s134
      %s137 = sphi 0, %s136
      %s151 = sphi 0, %s137
      %s155 = sphi 0, %s155
      %s157 = sphi 0, %s155
      %s158 = sphi 0, %s157
      %s172 = sphi 0, %s158
      %s178 = sphi 0, %s180
      %s181 = sphi 0, %s178
      %s182 = sphi 0, %s181
      %s198 = sphi 0, %s182
    $region4: #{tpu_custom_call.1} parent=1 // loop_header_branch
      %19 = sbr.rel (%p17) target = $region8
    $region5: #{tpu_custom_call.1} parent=1 // loop_body
      %s21 = ssub.s32 %s16, 1
      %s22 = ssub.s32 %s16, 2
      %s23 = sadd.s32 %s16, 1
      %s24 = ssub.s32 %s16, %s23
      %p25 = scmp.eq.s32.totalorder %s24, 0
      %s27 = sadd.s32 %s26, 1
      %s28 = scalar_select %p25, %s26, %s27
      %p31 = pneg %p25
      %p32 = scmp.eq.s32.totalorder %s16, 1
      %p33 = por %p31, %p32
      %p34 = scmp.ne.s32.totalorder %s26, %s29
      %p35 = scmp.eq.s32.totalorder %s16, 0
      %p36 = por %p34, %p35
      %p37 = scmp.ne.s32.totalorder %s26, %s29
      %p38 = scmp.eq.s32.totalorder %s21, 1
      %p39 = por %p37, %p38
      %p40 = scmp.ne.s32.totalorder %s29, %s30
      %p41 = scmp.eq.s32.totalorder %s21, 0
      %p42 = por %p40, %p41
      %p43 = scmp.ne.s32.totalorder %s29, %s30
      %p44 = scmp.eq.s32.totalorder %s22, 1
      %p45 = por %p43, %p44
      %p47 = scmp.ne.s32.totalorder %s30, %s46
      %p48 = scmp.eq.s32.totalorder %s22, 0
      %p49 = por %p47, %p48
      %s51 = sadd.s32 %s50, 1
      %p54 = scmp.eq.s32.totalorder %s16, 1
      %p55 = scmp.ne.s32.totalorder %s50, %s52
      %p56 = scmp.eq.s32.totalorder %s16, 0
      %p57 = por %p55, %p56
      %p58 = scmp.ne.s32.totalorder %s50, %s52
      %p59 = scmp.eq.s32.totalorder %s21, 1
      %p60 = por %p58, %p59
      %p61 = scmp.ne.s32.totalorder %s52, %s53
      %p62 = scmp.eq.s32.totalorder %s21, 0
      %p63 = por %p61, %p62
      %p64 = scmp.ne.s32.totalorder %s52, %s53
      %p65 = scmp.eq.s32.totalorder %s22, 1
      %p66 = por %p64, %p65
      %p68 = scmp.ne.s32.totalorder %s53, %s67
      %p69 = scmp.eq.s32.totalorder %s22, 0
      %p70 = por %p68, %p69
      %s72 = sadd.s32 %s71, 1
      %p75 = scmp.eq.s32.totalorder %s16, 1
      %p76 = scmp.ne.s32.totalorder %s71, %s73
      %p77 = scmp.eq.s32.totalorder %s16, 0
      %p78 = por %p76, %p77
      %p79 = scmp.ne.s32.totalorder %s71, %s73
      %p80 = scmp.eq.s32.totalorder %s21, 1
      %p81 = por %p79, %p80
      %p82 = scmp.ne.s32.totalorder %s73, %s74
      %p83 = scmp.eq.s32.totalorder %s21, 0
      %p84 = por %p82, %p83
      %p85 = scmp.ne.s32.totalorder %s73, %s74
      %p86 = scmp.eq.s32.totalorder %s22, 1
      %p87 = por %p85, %p86
      %p89 = scmp.ne.s32.totalorder %s74, %s88
      %p90 = scmp.eq.s32.totalorder %s22, 0
      %p91 = por %p89, %p90
      %s93 = sadd.s32 %s92, 1
      %p96 = scmp.eq.s32.totalorder %s16, 1
      %p97 = scmp.ne.s32.totalorder %s92, %s94
      %p98 = scmp.eq.s32.totalorder %s16, 0
      %p99 = por %p97, %p98
      %p100 = scmp.ne.s32.totalorder %s92, %s94
      %p101 = scmp.eq.s32.totalorder %s21, 1
      %p102 = por %p100, %p101
      %p103 = scmp.ne.s32.totalorder %s94, %s95
      %p104 = scmp.eq.s32.totalorder %s21, 0
      %p105 = por %p103, %p104
      %p106 = scmp.ne.s32.totalorder %s94, %s95
      %p107 = scmp.eq.s32.totalorder %s22, 1
      %p108 = por %p106, %p107
      %p110 = scmp.ne.s32.totalorder %s95, %s109
      %p111 = scmp.eq.s32.totalorder %s22, 0
      %p112 = por %p110, %p111
      %s114 = sadd.s32 %s113, 1
      %p117 = scmp.eq.s32.totalorder %s16, 1
      %p118 = scmp.ne.s32.totalorder %s113, %s115
      %p119 = scmp.eq.s32.totalorder %s16, 0
      %p120 = por %p118, %p119
      %p121 = scmp.ne.s32.totalorder %s113, %s115
      %p122 = scmp.eq.s32.totalorder %s21, 1
      %p123 = por %p121, %p122
      %p124 = scmp.ne.s32.totalorder %s115, %s116
      %p125 = scmp.eq.s32.totalorder %s21, 0
      %p126 = por %p124, %p125
      %p127 = scmp.ne.s32.totalorder %s115, %s116
      %p128 = scmp.eq.s32.totalorder %s22, 1
      %p129 = por %p127, %p128
      %p131 = scmp.ne.s32.totalorder %s116, %s130
      %p132 = scmp.eq.s32.totalorder %s22, 0
      %p133 = por %p131, %p132
      %s135 = sadd.s32 %s134, 1
      %p138 = scmp.eq.s32.totalorder %s16, 1
      %p139 = scmp.ne.s32.totalorder %s134, %s136
      %p140 = scmp.eq.s32.totalorder %s16, 0
      %p141 = por %p139, %p140
      %p142 = scmp.ne.s32.totalorder %s134, %s136
      %p143 = scmp.eq.s32.totalorder %s21, 1
      %p144 = por %p142, %p143
      %p145 = scmp.ne.s32.totalorder %s136, %s137
      %p146 = scmp.eq.s32.totalorder %s21, 0
      %p147 = por %p145, %p146
      %p148 = scmp.ne.s32.totalorder %s136, %s137
      %p149 = scmp.eq.s32.totalorder %s22, 1
      %p150 = por %p148, %p149
      %p152 = scmp.ne.s32.totalorder %s137, %s151
      %p153 = scmp.eq.s32.totalorder %s22, 0
      %p154 = por %p152, %p153
      %s156 = sadd.s32 %s155, 1
      %p159 = scmp.eq.s32.totalorder %s16, 1
      %p160 = scmp.ne.s32.totalorder %s155, %s157
      %p161 = scmp.eq.s32.totalorder %s16, 0
      %p162 = por %p160, %p161
      %p163 = scmp.ne.s32.totalorder %s155, %s157
      %p164 = scmp.eq.s32.totalorder %s21, 1
      %p165 = por %p163, %p164
      %p166 = scmp.ne.s32.totalorder %s157, %s158
      %p167 = scmp.eq.s32.totalorder %s21, 0
      %p168 = por %p166, %p167
      %p169 = scmp.ne.s32.totalorder %s157, %s158
      %p170 = scmp.eq.s32.totalorder %s22, 1
      %p171 = por %p169, %p170
      %p173 = scmp.ne.s32.totalorder %s158, %s172
      %p174 = scmp.eq.s32.totalorder %s22, 0
      %p175 = por %p173, %p174
      %s176 = ssub.s32 %s16, %s23
      %p177 = scmp.eq.s32.totalorder %s176, 0
      %s179 = sadd.s32 %s178, 1
      %s180 = scalar_select %p177, %s178, %s179
      %p183 = pneg %p177
      %p184 = scmp.eq.s32.totalorder %s16, 1
      %p185 = por %p183, %p184
      %p186 = scmp.ne.s32.totalorder %s178, %s181
      %p187 = scmp.eq.s32.totalorder %s16, 0
      %p188 = por %p186, %p187
      %p189 = scmp.ne.s32.totalorder %s178, %s181
      %p190 = scmp.eq.s32.totalorder %s21, 1
      %p191 = por %p189, %p190
      %p192 = scmp.ne.s32.totalorder %s181, %s182
      %p193 = scmp.eq.s32.totalorder %s21, 0
      %p194 = por %p192, %p193
      %p195 = scmp.ne.s32.totalorder %s181, %s182
      %p196 = scmp.eq.s32.totalorder %s22, 1
      %p197 = por %p195, %p196
      %p199 = scmp.ne.s32.totalorder %s182, %s198
      %p200 = scmp.eq.s32.totalorder %s22, 0
      %p201 = por %p199, %p200
      %p202 = scmp.le.s32.totalorder 1, %s16
      %p203 = scmp.lt.s32.totalorder %s16, 3
      %p204 = pnand %p202, %p203
      %p205 = pneg %p204
      // Predicated region
      $region9: #{tpu_custom_call.1} parent=5 // pred_check
        _
      $region10: #{tpu_custom_call.1} parent=5 // pred_check_branch
        %207 = sbr.rel (%p204) target = $region12
      $region11: #{tpu_custom_call.1} parent=5 // pred_region
        %s208 = ssub.s32 %s16, 1
        // Predicated region
        $region13: #{tpu_custom_call.1} parent=11 // pred_check
          %p209 = pneg %p63
        $region14: #{tpu_custom_call.1} parent=11 // pred_check_branch
          %211 = sbr.rel (%p209) target = $region16
        $region15: #{tpu_custom_call.1} parent=11 // pred_region
          _
        $region16: #{tpu_custom_call.1} parent=11 // pred_fallthru
          _
        // Predicated region
        $region17: #{tpu_custom_call.1} parent=11 // pred_check
          %p212 = pneg %p84
        $region18: #{tpu_custom_call.1} parent=11 // pred_check_branch
          %214 = sbr.rel (%p212) target = $region20
        $region19: #{tpu_custom_call.1} parent=11 // pred_region
          _
        $region20: #{tpu_custom_call.1} parent=11 // pred_fallthru
          _
        // Predicated region
        $region21: #{tpu_custom_call.1} parent=11 // pred_check
          %p215 = pneg %p105
        $region22: #{tpu_custom_call.1} parent=11 // pred_check_branch
          %217 = sbr.rel (%p215) target = $region24
        $region23: #{tpu_custom_call.1} parent=11 // pred_region
          _
        $region24: #{tpu_custom_call.1} parent=11 // pred_fallthru
          _
        // Predicated region
        $region25: #{tpu_custom_call.1} parent=11 // pred_check
          %p218 = pneg %p126
        $region26: #{tpu_custom_call.1} parent=11 // pred_check_branch
          %220 = sbr.rel (%p218) target = $region28
        $region27: #{tpu_custom_call.1} parent=11 // pred_region
          _
        $region28: #{tpu_custom_call.1} parent=11 // pred_fallthru
          _
        // Predicated region
        $region29: #{tpu_custom_call.1} parent=11 // pred_check
          %p221 = pneg %p147
        $region30: #{tpu_custom_call.1} parent=11 // pred_check_branch
          %223 = sbr.rel (%p221) target = $region32
        $region31: #{tpu_custom_call.1} parent=11 // pred_region
          _
        $region32: #{tpu_custom_call.1} parent=11 // pred_fallthru
          _
        // Predicated region
        $region33: #{tpu_custom_call.1} parent=11 // pred_check
          %p224 = pneg %p168
        $region34: #{tpu_custom_call.1} parent=11 // pred_check_branch
          %226 = sbr.rel (%p224) target = $region36
        $region35: #{tpu_custom_call.1} parent=11 // pred_region
          _
        $region36: #{tpu_custom_call.1} parent=11 // pred_fallthru
          _
      $region12: #{tpu_custom_call.1} parent=5 // pred_fallthru
        _
      %p227 = scmp.lt.s32.totalorder %s16, 2
      // Predicated region
      $region37: #{tpu_custom_call.1} parent=5 // pred_check
        %p228 = pneg %p227
      $region38: #{tpu_custom_call.1} parent=5 // pred_check_branch
        %230 = sbr.rel (%p228) target = $region40
      $region39: #{tpu_custom_call.1} parent=5 // pred_region
        // Predicated region
        $region41: #{tpu_custom_call.1} parent=39 // pred_check
          %p231 = pneg %p36
        $region42: #{tpu_custom_call.1} parent=39 // pred_check_branch
          %233 = sbr.rel (%p231) target = $region44
        $region43: #{tpu_custom_call.1} parent=39 // pred_region
          %p234 = scmp.lt.s32.totalorder %s16, 1
          %s235 = scalar_select %p234, %s16, 1
          %s236 = smul.addr %s235, 32
          %s237 = smul.addr %s236, 8
          %s238 = scalar_lea.vmem %s0, %s237
        $region44: #{tpu_custom_call.1} parent=39 // pred_fallthru
          _
      $region40: #{tpu_custom_call.1} parent=5 // pred_fallthru
        _
      %p239 = scmp.le.s32.totalorder 1, %s16
      %p240 = scmp.lt.s32.totalorder %s16, 3
      %p241 = pnand %p239, %p240
      %p242 = pneg %p241
      // Predicated region
      $region45: #{tpu_custom_call.1} parent=5 // pred_check
        _
      $region46: #{tpu_custom_call.1} parent=5 // pred_check_branch
        %244 = sbr.rel (%p241) target = $region48
      $region47: #{tpu_custom_call.1} parent=5 // pred_region
        %s245 = ssub.s32 %s16, 1
        %p246 = scmp.lt.s32.totalorder %s21, 1
        %s247 = scalar_select %p246, %s21, 1
        %s248 = smul.addr %s247, 32
        %s249 = smul.addr %s248, 8
        %s250 = scalar_lea.vmem %s0, %s249
        %p251 = pneg %p42
        %p252 = pneg %p39
        %p253 = pneg %p63
        %p254 = pneg %p60
        %p255 = pneg %p84
        %p256 = pneg %p81
        %p257 = pneg %p105
        %p258 = pneg %p102
        %p259 = pneg %p126
        %p260 = pneg %p123
        %p261 = pneg %p147
        %p262 = pneg %p144
        %p263 = pneg %p168
        %p264 = pneg %p165
        %p265 = pneg %p194
        %p266 = pneg %p191
        %s267 = sand.u32 %s181, 1
        %s268 = scalar_lea.sflag [#allocation5], %s267
        %s269 = sand.u32 %s181, 1
        %s270 = smul.addr %s269, 64
        %s271 = scalar_lea.vmem [#allocation4], %s270
        %p272 = scmp.lt.s32.totalorder %s21, 1
        %s273 = scalar_select %p272, %s21, 1
        %s274 = smul.addr %s273, 32
        %s275 = smul.addr %s274, 8
        %s276 = scalar_lea.vmem %s0, %s275
        %v278 = vld [vmem:[%s276] sm:$0xff]
        %v279 = vld [vmem:[%s276 + $0x8] sm:$0xff]
        %v280 = vld [vmem:[%s276 + $0x10] sm:$0xff]
        %v281 = vld [vmem:[%s276 + $0x18] sm:$0xff]
        %v282 = vld [vmem:[%s276 + $0x20] sm:$0xff]
        %v283 = vld [vmem:[%s276 + $0x28] sm:$0xff]
        %v284 = vld [vmem:[%s276 + $0x30] sm:$0xff]
        %v285 = vld [vmem:[%s276 + $0x38] sm:$0xff]
        %v286 = vld [vmem:[%s276 + $0x40] sm:$0xff]
        %v287 = vld [vmem:[%s276 + $0x48] sm:$0xff]
        %v288 = vld [vmem:[%s276 + $0x50] sm:$0xff]
        %v289 = vld [vmem:[%s276 + $0x58] sm:$0xff]
        %v290 = vld [vmem:[%s276 + $0x60] sm:$0xff]
        %v291 = vld [vmem:[%s276 + $0x68] sm:$0xff]
        %v292 = vld [vmem:[%s276 + $0x70] sm:$0xff]
        %v293 = vld [vmem:[%s276 + $0x78] sm:$0xff]
        %v294 = vld [vmem:[%s276 + $0x80] sm:$0xff]
        %v295 = vld [vmem:[%s276 + $0x88] sm:$0xff]
        %v296 = vld [vmem:[%s276 + $0x90] sm:$0xff]
        %v297 = vld [vmem:[%s276 + $0x98] sm:$0xff]
        %v298 = vld [vmem:[%s276 + $0xa0] sm:$0xff]
        %v299 = vld [vmem:[%s276 + $0xa8] sm:$0xff]
        %v300 = vld [vmem:[%s276 + $0xb0] sm:$0xff]
        %v301 = vld [vmem:[%s276 + $0xb8] sm:$0xff]
        %v302 = vld [vmem:[%s276 + $0xc0] sm:$0xff]
        %v303 = vld [vmem:[%s276 + $0xc8] sm:$0xff]
        %v304 = vld [vmem:[%s276 + $0xd0] sm:$0xff]
        %v305 = vld [vmem:[%s276 + $0xd8] sm:$0xff]
        %v306 = vld [vmem:[%s276 + $0xe0] sm:$0xff]
        %v307 = vld [vmem:[%s276 + $0xe8] sm:$0xff]
        %v308 = vld [vmem:[%s276 + $0xf0] sm:$0xff]
        %v309 = vld [vmem:[%s276 + $0xf8] sm:$0xff]
        %vm310 = vcmask 31744
        %v311 = vsel %vm310, %v278, -inf
        %v312 = vsel %vm310, %v280, -inf
        %v313 = vmax.f32 %v311, %v312
        %v314 = vsel %vm310, %v279, -inf
        %v315 = vsel %vm310, %v281, -inf
        %v316 = vmax.f32 %v314, %v315
        %v317 = vsel %vm310, %v282, -inf
        %v318 = vsel %vm310, %v284, -inf
        %v319 = vmax.f32 %v317, %v318
        %v320 = vsel %vm310, %v283, -inf
        %v321 = vsel %vm310, %v285, -inf
        %v322 = vmax.f32 %v320, %v321
        %v323 = vsel %vm310, %v286, -inf
        %v324 = vsel %vm310, %v288, -inf
        %v325 = vmax.f32 %v323, %v324
        %v326 = vsel %vm310, %v287, -inf
        %v327 = vsel %vm310, %v289, -inf
        %v328 = vmax.f32 %v326, %v327
        %v329 = vsel %vm310, %v290, -inf
        %v330 = vsel %vm310, %v292, -inf
        %v331 = vmax.f32 %v329, %v330
        %v332 = vsel %vm310, %v291, -inf
        %v333 = vsel %vm310, %v293, -inf
        %v334 = vmax.f32 %v332, %v333
        %v335 = vsel %vm310, %v294, -inf
        %v336 = vsel %vm310, %v296, -inf
        %v337 = vmax.f32 %v335, %v336
        %v338 = vsel %vm310, %v295, -inf
        %v339 = vsel %vm310, %v297, -inf
        %v340 = vmax.f32 %v338, %v339
        %v341 = vsel %vm310, %v298, -inf
        %v342 = vsel %vm310, %v300, -inf
        %v343 = vmax.f32 %v341, %v342
        %v344 = vsel %vm310, %v299, -inf
        %v345 = vsel %vm310, %v301, -inf
        %v346 = vmax.f32 %v344, %v345
        %v347 = vsel %vm310, %v302, -inf
        %v348 = vsel %vm310, %v304, -inf
        %v349 = vmax.f32 %v347, %v348
        %v350 = vsel %vm310, %v303, -inf
        %v351 = vsel %vm310, %v305, -inf
        %v352 = vmax.f32 %v350, %v351
        %v353 = vsel %vm310, %v306, -inf
        %v354 = vsel %vm310, %v308, -inf
        %v355 = vmax.f32 %v353, %v354
        %v356 = vsel %vm310, %v307, -inf
        %v357 = vsel %vm310, %v309, -inf
        %v358 = vmax.f32 %v356, %v357
        %v375 = vcombine.high %v313, %v313
        %v377 = vunpack.c.l.s4 1983009808
        %v378 = vunpack.c.0.s8 %v377
        %v379 = vlaneseq
        %v380 = vshrl.u32 %v379, 7
        %v381 = vsub.s32 %v378, %v380
        %v382 = vrot.slane %v313, %v381
        %v384 = vunpack.c.l.s4 1983009808
        %v385 = vunpack.c.0.s8 %v384
        %v386 = vlaneseq
        %v387 = vshrl.u32 %v386, 7
        %v388 = vsub.s32 %v385, %v387
        %v389 = vrot.slane %v375, %v388
        %v390 = vcombine.high %v382, %v382
        %v391 = vcombine.high %v389, %v389
        %v392 = vcombine.high %v316, %v316
        %v394 = vunpack.c.l.s4 1983009808
        %v395 = vunpack.c.0.s8 %v394
        %v396 = vlaneseq
        %v397 = vshrl.u32 %v396, 7
        %v398 = vsub.s32 %v395, %v397
        %v399 = vrot.slane %v316, %v398
        %v401 = vunpack.c.l.s4 1983009808
        %v402 = vunpack.c.0.s8 %v401
        %v403 = vlaneseq
        %v404 = vshrl.u32 %v403, 7
        %v405 = vsub.s32 %v402, %v404
        %v406 = vrot.slane %v392, %v405
        %v407 = vcombine.high %v399, %v399
        %v408 = vcombine.high %v406, %v406
        %v409 = vcombine.high %v319, %v319
        %v411 = vunpack.c.l.s4 1983009808
        %v412 = vunpack.c.0.s8 %v411
        %v413 = vlaneseq
        %v414 = vshrl.u32 %v413, 7
        %v415 = vsub.s32 %v412, %v414
        %v416 = vrot.slane %v319, %v415
        %v418 = vunpack.c.l.s4 1983009808
        %v419 = vunpack.c.0.s8 %v418
        %v420 = vlaneseq
        %v421 = vshrl.u32 %v420, 7
        %v422 = vsub.s32 %v419, %v421
        %v423 = vrot.slane %v409, %v422
        %v424 = vcombine.high %v416, %v416
        %v425 = vcombine.high %v423, %v423
        %v426 = vcombine.high %v322, %v322
        %v428 = vunpack.c.l.s4 1983009808
        %v429 = vunpack.c.0.s8 %v428
        %v430 = vlaneseq
        %v431 = vshrl.u32 %v430, 7
        %v432 = vsub.s32 %v429, %v431
        %v433 = vrot.slane %v322, %v432
        %v435 = vunpack.c.l.s4 1983009808
        %v436 = vunpack.c.0.s8 %v435
        %v437 = vlaneseq
        %v438 = vshrl.u32 %v437, 7
        %v439 = vsub.s32 %v436, %v438
        %v440 = vrot.slane %v426, %v439
        %v441 = vcombine.high %v433, %v433
        %v442 = vcombine.high %v440, %v440
        %v443 = vcombine.high %v325, %v325
        %v445 = vunpack.c.l.s4 1983009808
        %v446 = vunpack.c.0.s8 %v445
        %v447 = vlaneseq
        %v448 = vshrl.u32 %v447, 7
        %v449 = vsub.s32 %v446, %v448
        %v450 = vrot.slane %v325, %v449
        %v452 = vunpack.c.l.s4 1983009808
        %v453 = vunpack.c.0.s8 %v452
        %v454 = vlaneseq
        %v455 = vshrl.u32 %v454, 7
        %v456 = vsub.s32 %v453, %v455
        %v457 = vrot.slane %v443, %v456
        %v458 = vcombine.high %v450, %v450
        %v459 = vcombine.high %v457, %v457
        %v460 = vcombine.high %v328, %v328
        %v462 = vunpack.c.l.s4 1983009808
        %v463 = vunpack.c.0.s8 %v462
        %v464 = vlaneseq
        %v465 = vshrl.u32 %v464, 7
        %v466 = vsub.s32 %v463, %v465
        %v467 = vrot.slane %v328, %v466
        %v469 = vunpack.c.l.s4 1983009808
        %v470 = vunpack.c.0.s8 %v469
        %v471 = vlaneseq
        %v472 = vshrl.u32 %v471, 7
        %v473 = vsub.s32 %v470, %v472
        %v474 = vrot.slane %v460, %v473
        %v475 = vcombine.high %v467, %v467
        %v476 = vcombine.high %v474, %v474
        %v477 = vcombine.high %v331, %v331
        %v479 = vunpack.c.l.s4 1983009808
        %v480 = vunpack.c.0.s8 %v479
        %v481 = vlaneseq
        %v482 = vshrl.u32 %v481, 7
        %v483 = vsub.s32 %v480, %v482
        %v484 = vrot.slane %v331, %v483
        %v486 = vunpack.c.l.s4 1983009808
        %v487 = vunpack.c.0.s8 %v486
        %v488 = vlaneseq
        %v489 = vshrl.u32 %v488, 7
        %v490 = vsub.s32 %v487, %v489
        %v491 = vrot.slane %v477, %v490
        %v492 = vcombine.high %v484, %v484
        %v493 = vcombine.high %v491, %v491
        %v494 = vcombine.high %v334, %v334
        %v496 = vunpack.c.l.s4 1983009808
        %v497 = vunpack.c.0.s8 %v496
        %v498 = vlaneseq
        %v499 = vshrl.u32 %v498, 7
        %v500 = vsub.s32 %v497, %v499
        %v501 = vrot.slane %v334, %v500
        %v503 = vunpack.c.l.s4 1983009808
        %v504 = vunpack.c.0.s8 %v503
        %v505 = vlaneseq
        %v506 = vshrl.u32 %v505, 7
        %v507 = vsub.s32 %v504, %v506
        %v508 = vrot.slane %v494, %v507
        %v509 = vcombine.high %v501, %v501
        %v510 = vcombine.high %v508, %v508
        %v511 = vcombine.high %v337, %v337
        %v513 = vunpack.c.l.s4 1983009808
        %v514 = vunpack.c.0.s8 %v513
        %v515 = vlaneseq
        %v516 = vshrl.u32 %v515, 7
        %v517 = vsub.s32 %v514, %v516
        %v518 = vrot.slane %v337, %v517
        %v520 = vunpack.c.l.s4 1983009808
        %v521 = vunpack.c.0.s8 %v520
        %v522 = vlaneseq
        %v523 = vshrl.u32 %v522, 7
        %v524 = vsub.s32 %v521, %v523
        %v525 = vrot.slane %v511, %v524
        %v526 = vcombine.high %v518, %v518
        %v527 = vcombine.high %v525, %v525
        %v528 = vcombine.high %v340, %v340
        %v530 = vunpack.c.l.s4 1983009808
        %v531 = vunpack.c.0.s8 %v530
        %v532 = vlaneseq
        %v533 = vshrl.u32 %v532, 7
        %v534 = vsub.s32 %v531, %v533
        %v535 = vrot.slane %v340, %v534
        %v537 = vunpack.c.l.s4 1983009808
        %v538 = vunpack.c.0.s8 %v537
        %v539 = vlaneseq
        %v540 = vshrl.u32 %v539, 7
        %v541 = vsub.s32 %v538, %v540
        %v542 = vrot.slane %v528, %v541
        %v543 = vcombine.high %v535, %v535
        %v544 = vcombine.high %v542, %v542
        %v545 = vcombine.high %v343, %v343
        %v547 = vunpack.c.l.s4 1983009808
        %v548 = vunpack.c.0.s8 %v547
        %v549 = vlaneseq
        %v550 = vshrl.u32 %v549, 7
        %v551 = vsub.s32 %v548, %v550
        %v552 = vrot.slane %v343, %v551
        %v554 = vunpack.c.l.s4 1983009808
        %v555 = vunpack.c.0.s8 %v554
        %v556 = vlaneseq
        %v557 = vshrl.u32 %v556, 7
        %v558 = vsub.s32 %v555, %v557
        %v559 = vrot.slane %v545, %v558
        %v560 = vcombine.high %v552, %v552
        %v561 = vcombine.high %v559, %v559
        %v562 = vcombine.high %v346, %v346
        %v564 = vunpack.c.l.s4 1983009808
        %v565 = vunpack.c.0.s8 %v564
        %v566 = vlaneseq
        %v567 = vshrl.u32 %v566, 7
        %v568 = vsub.s32 %v565, %v567
        %v569 = vrot.slane %v346, %v568
        %v571 = vunpack.c.l.s4 1983009808
        %v572 = vunpack.c.0.s8 %v571
        %v573 = vlaneseq
        %v574 = vshrl.u32 %v573, 7
        %v575 = vsub.s32 %v572, %v574
        %v576 = vrot.slane %v562, %v575
        %v577 = vcombine.high %v569, %v569
        %v578 = vcombine.high %v576, %v576
        %v579 = vcombine.high %v349, %v349
        %v581 = vunpack.c.l.s4 1983009808
        %v582 = vunpack.c.0.s8 %v581
        %v583 = vlaneseq
        %v584 = vshrl.u32 %v583, 7
        %v585 = vsub.s32 %v582, %v584
        %v586 = vrot.slane %v349, %v585
        %v588 = vunpack.c.l.s4 1983009808
        %v589 = vunpack.c.0.s8 %v588
        %v590 = vlaneseq
        %v591 = vshrl.u32 %v590, 7
        %v592 = vsub.s32 %v589, %v591
        %v593 = vrot.slane %v579, %v592
        %v594 = vcombine.high %v586, %v586
        %v595 = vcombine.high %v593, %v593
        %v596 = vcombine.high %v352, %v352
        %v598 = vunpack.c.l.s4 1983009808
        %v599 = vunpack.c.0.s8 %v598
        %v600 = vlaneseq
        %v601 = vshrl.u32 %v600, 7
        %v602 = vsub.s32 %v599, %v601
        %v603 = vrot.slane %v352, %v602
        %v605 = vunpack.c.l.s4 1983009808
        %v606 = vunpack.c.0.s8 %v605
        %v607 = vlaneseq
        %v608 = vshrl.u32 %v607, 7
        %v609 = vsub.s32 %v606, %v608
        %v610 = vrot.slane %v596, %v609
        %v611 = vcombine.high %v603, %v603
        %v612 = vcombine.high %v610, %v610
        %v613 = vcombine.high %v355, %v355
        %v615 = vunpack.c.l.s4 1983009808
        %v616 = vunpack.c.0.s8 %v615
        %v617 = vlaneseq
        %v618 = vshrl.u32 %v617, 7
        %v619 = vsub.s32 %v616, %v618
        %v620 = vrot.slane %v355, %v619
        %v622 = vunpack.c.l.s4 1983009808
        %v623 = vunpack.c.0.s8 %v622
        %v624 = vlaneseq
        %v625 = vshrl.u32 %v624, 7
        %v626 = vsub.s32 %v623, %v625
        %v627 = vrot.slane %v613, %v626
        %v628 = vcombine.high %v620, %v620
        %v629 = vcombine.high %v627, %v627
        %v630 = vcombine.high %v358, %v358
        %v632 = vunpack.c.l.s4 1983009808
        %v633 = vunpack.c.0.s8 %v632
        %v634 = vlaneseq
        %v635 = vshrl.u32 %v634, 7
        %v636 = vsub.s32 %v633, %v635
        %v637 = vrot.slane %v358, %v636
        %v639 = vunpack.c.l.s4 1983009808
        %v640 = vunpack.c.0.s8 %v639
        %v641 = vlaneseq
        %v642 = vshrl.u32 %v641, 7
        %v643 = vsub.s32 %v640, %v642
        %v644 = vrot.slane %v630, %v643
        %v645 = vcombine.high %v637, %v637
        %v646 = vcombine.high %v644, %v644
        %vm711 = vcmask 25600
        %v712 = vsel %vm711, %v382, -inf
        %v713 = vrot.slane %v712, 4
        %v714 = vmax.f32 %v712, %v713
        %v715 = vrot.slane %v714, 2
        %v716 = vmax.f32 %v714, %v715
        %v717 = vrot.slane %v716, 1
        %v718 = vmax.f32 %v716, %v717
        %v719 = vsel %vm711, %v390, -inf
        %v720 = vrot.slane %v719, 4
        %v721 = vmax.f32 %v719, %v720
        %v722 = vrot.slane %v721, 2
        %v723 = vmax.f32 %v721, %v722
        %v724 = vrot.slane %v723, 1
        %v725 = vmax.f32 %v723, %v724
        %v726 = vsel %vm711, %v389, -inf
        %v727 = vrot.slane %v726, 4
        %v728 = vmax.f32 %v726, %v727
        %v729 = vrot.slane %v728, 2
        %v730 = vmax.f32 %v728, %v729
        %v731 = vrot.slane %v730, 1
        %v732 = vmax.f32 %v730, %v731
        %v733 = vsel %vm711, %v391, -inf
        %v734 = vrot.slane %v733, 4
        %v735 = vmax.f32 %v733, %v734
        %v736 = vrot.slane %v735, 2
        %v737 = vmax.f32 %v735, %v736
        %v738 = vrot.slane %v737, 1
        %v739 = vmax.f32 %v737, %v738
        %v740 = vsel %vm711, %v399, -inf
        %v741 = vrot.slane %v740, 4
        %v742 = vmax.f32 %v740, %v741
        %v743 = vrot.slane %v742, 2
        %v744 = vmax.f32 %v742, %v743
        %v745 = vrot.slane %v744, 1
        %v746 = vmax.f32 %v744, %v745
        %v747 = vsel %vm711, %v407, -inf
        %v748 = vrot.slane %v747, 4
        %v749 = vmax.f32 %v747, %v748
        %v750 = vrot.slane %v749, 2
        %v751 = vmax.f32 %v749, %v750
        %v752 = vrot.slane %v751, 1
        %v753 = vmax.f32 %v751, %v752
        %v754 = vsel %vm711, %v406, -inf
        %v755 = vrot.slane %v754, 4
        %v756 = vmax.f32 %v754, %v755
        %v757 = vrot.slane %v756, 2
        %v758 = vmax.f32 %v756, %v757
        %v759 = vrot.slane %v758, 1
        %v760 = vmax.f32 %v758, %v759
        %v761 = vsel %vm711, %v408, -inf
        %v762 = vrot.slane %v761, 4
        %v763 = vmax.f32 %v761, %v762
        %v764 = vrot.slane %v763, 2
        %v765 = vmax.f32 %v763, %v764
        %v766 = vrot.slane %v765, 1
        %v767 = vmax.f32 %v765, %v766
        %v768 = vsel %vm711, %v416, -inf
        %v769 = vrot.slane %v768, 4
        %v770 = vmax.f32 %v768, %v769
        %v771 = vrot.slane %v770, 2
        %v772 = vmax.f32 %v770, %v771
        %v773 = vrot.slane %v772, 1
        %v774 = vmax.f32 %v772, %v773
        %v775 = vsel %vm711, %v424, -inf
        %v776 = vrot.slane %v775, 4
        %v777 = vmax.f32 %v775, %v776
        %v778 = vrot.slane %v777, 2
        %v779 = vmax.f32 %v777, %v778
        %v780 = vrot.slane %v779, 1
        %v781 = vmax.f32 %v779, %v780
        %v782 = vsel %vm711, %v423, -inf
        %v783 = vrot.slane %v782, 4
        %v784 = vmax.f32 %v782, %v783
        %v785 = vrot.slane %v784, 2
        %v786 = vmax.f32 %v784, %v785
        %v787 = vrot.slane %v786, 1
        %v788 = vmax.f32 %v786, %v787
        %v789 = vsel %vm711, %v425, -inf
        %v790 = vrot.slane %v789, 4
        %v791 = vmax.f32 %v789, %v790
        %v792 = vrot.slane %v791, 2
        %v793 = vmax.f32 %v791, %v792
        %v794 = vrot.slane %v793, 1
        %v795 = vmax.f32 %v793, %v794
        %v796 = vsel %vm711, %v433, -inf
        %v797 = vrot.slane %v796, 4
        %v798 = vmax.f32 %v796, %v797
        %v799 = vrot.slane %v798, 2
        %v800 = vmax.f32 %v798, %v799
        %v801 = vrot.slane %v800, 1
        %v802 = vmax.f32 %v800, %v801
        %v803 = vsel %vm711, %v441, -inf
        %v804 = vrot.slane %v803, 4
        %v805 = vmax.f32 %v803, %v804
        %v806 = vrot.slane %v805, 2
        %v807 = vmax.f32 %v805, %v806
        %v808 = vrot.slane %v807, 1
        %v809 = vmax.f32 %v807, %v808
        %v810 = vsel %vm711, %v440, -inf
        %v811 = vrot.slane %v810, 4
        %v812 = vmax.f32 %v810, %v811
        %v813 = vrot.slane %v812, 2
        %v814 = vmax.f32 %v812, %v813
        %v815 = vrot.slane %v814, 1
        %v816 = vmax.f32 %v814, %v815
        %v817 = vsel %vm711, %v442, -inf
        %v818 = vrot.slane %v817, 4
        %v819 = vmax.f32 %v817, %v818
        %v820 = vrot.slane %v819, 2
        %v821 = vmax.f32 %v819, %v820
        %v822 = vrot.slane %v821, 1
        %v823 = vmax.f32 %v821, %v822
        %v824 = vsel %vm711, %v450, -inf
        %v825 = vrot.slane %v824, 4
        %v826 = vmax.f32 %v824, %v825
        %v827 = vrot.slane %v826, 2
        %v828 = vmax.f32 %v826, %v827
        %v829 = vrot.slane %v828, 1
        %v830 = vmax.f32 %v828, %v829
        %v831 = vsel %vm711, %v458, -inf
        %v832 = vrot.slane %v831, 4
        %v833 = vmax.f32 %v831, %v832
        %v834 = vrot.slane %v833, 2
        %v835 = vmax.f32 %v833, %v834
        %v836 = vrot.slane %v835, 1
        %v837 = vmax.f32 %v835, %v836
        %v838 = vsel %vm711, %v457, -inf
        %v839 = vrot.slane %v838, 4
        %v840 = vmax.f32 %v838, %v839
        %v841 = vrot.slane %v840, 2
        %v842 = vmax.f32 %v840, %v841
        %v843 = vrot.slane %v842, 1
        %v844 = vmax.f32 %v842, %v843
        %v845 = vsel %vm711, %v459, -inf
        %v846 = vrot.slane %v845, 4
        %v847 = vmax.f32 %v845, %v846
        %v848 = vrot.slane %v847, 2
        %v849 = vmax.f32 %v847, %v848
        %v850 = vrot.slane %v849, 1
        %v851 = vmax.f32 %v849, %v850
        %v852 = vsel %vm711, %v467, -inf
        %v853 = vrot.slane %v852, 4
        %v854 = vmax.f32 %v852, %v853
        %v855 = vrot.slane %v854, 2
        %v856 = vmax.f32 %v854, %v855
        %v857 = vrot.slane %v856, 1
        %v858 = vmax.f32 %v856, %v857
        %v859 = vsel %vm711, %v475, -inf
        %v860 = vrot.slane %v859, 4
        %v861 = vmax.f32 %v859, %v860
        %v862 = vrot.slane %v861, 2
        %v863 = vmax.f32 %v861, %v862
        %v864 = vrot.slane %v863, 1
        %v865 = vmax.f32 %v863, %v864
        %v866 = vsel %vm711, %v474, -inf
        %v867 = vrot.slane %v866, 4
        %v868 = vmax.f32 %v866, %v867
        %v869 = vrot.slane %v868, 2
        %v870 = vmax.f32 %v868, %v869
        %v871 = vrot.slane %v870, 1
        %v872 = vmax.f32 %v870, %v871
        %v873 = vsel %vm711, %v476, -inf
        %v874 = vrot.slane %v873, 4
        %v875 = vmax.f32 %v873, %v874
        %v876 = vrot.slane %v875, 2
        %v877 = vmax.f32 %v875, %v876
        %v878 = vrot.slane %v877, 1
        %v879 = vmax.f32 %v877, %v878
        %v880 = vsel %vm711, %v484, -inf
        %v881 = vrot.slane %v880, 4
        %v882 = vmax.f32 %v880, %v881
        %v883 = vrot.slane %v882, 2
        %v884 = vmax.f32 %v882, %v883
        %v885 = vrot.slane %v884, 1
        %v886 = vmax.f32 %v884, %v885
        %v887 = vsel %vm711, %v492, -inf
        %v888 = vrot.slane %v887, 4
        %v889 = vmax.f32 %v887, %v888
        %v890 = vrot.slane %v889, 2
        %v891 = vmax.f32 %v889, %v890
        %v892 = vrot.slane %v891, 1
        %v893 = vmax.f32 %v891, %v892
        %v894 = vsel %vm711, %v491, -inf
        %v895 = vrot.slane %v894, 4
        %v896 = vmax.f32 %v894, %v895
        %v897 = vrot.slane %v896, 2
        %v898 = vmax.f32 %v896, %v897
        %v899 = vrot.slane %v898, 1
        %v900 = vmax.f32 %v898, %v899
        %v901 = vsel %vm711, %v493, -inf
        %v902 = vrot.slane %v901, 4
        %v903 = vmax.f32 %v901, %v902
        %v904 = vrot.slane %v903, 2
        %v905 = vmax.f32 %v903, %v904
        %v906 = vrot.slane %v905, 1
        %v907 = vmax.f32 %v905, %v906
        %v908 = vsel %vm711, %v501, -inf
        %v909 = vrot.slane %v908, 4
        %v910 = vmax.f32 %v908, %v909
        %v911 = vrot.slane %v910, 2
        %v912 = vmax.f32 %v910, %v911
        %v913 = vrot.slane %v912, 1
        %v914 = vmax.f32 %v912, %v913
        %v915 = vsel %vm711, %v509, -inf
        %v916 = vrot.slane %v915, 4
        %v917 = vmax.f32 %v915, %v916
        %v918 = vrot.slane %v917, 2
        %v919 = vmax.f32 %v917, %v918
        %v920 = vrot.slane %v919, 1
        %v921 = vmax.f32 %v919, %v920
        %v922 = vsel %vm711, %v508, -inf
        %v923 = vrot.slane %v922, 4
        %v924 = vmax.f32 %v922, %v923
        %v925 = vrot.slane %v924, 2
        %v926 = vmax.f32 %v924, %v925
        %v927 = vrot.slane %v926, 1
        %v928 = vmax.f32 %v926, %v927
        %v929 = vsel %vm711, %v510, -inf
        %v930 = vrot.slane %v929, 4
        %v931 = vmax.f32 %v929, %v930
        %v932 = vrot.slane %v931, 2
        %v933 = vmax.f32 %v931, %v932
        %v934 = vrot.slane %v933, 1
        %v935 = vmax.f32 %v933, %v934
        %v936 = vsel %vm711, %v518, -inf
        %v937 = vrot.slane %v936, 4
        %v938 = vmax.f32 %v936, %v937
        %v939 = vrot.slane %v938, 2
        %v940 = vmax.f32 %v938, %v939
        %v941 = vrot.slane %v940, 1
        %v942 = vmax.f32 %v940, %v941
        %v943 = vsel %vm711, %v526, -inf
        %v944 = vrot.slane %v943, 4
        %v945 = vmax.f32 %v943, %v944
        %v946 = vrot.slane %v945, 2
        %v947 = vmax.f32 %v945, %v946
        %v948 = vrot.slane %v947, 1
        %v949 = vmax.f32 %v947, %v948
        %v950 = vsel %vm711, %v525, -inf
        %v951 = vrot.slane %v950, 4
        %v952 = vmax.f32 %v950, %v951
        %v953 = vrot.slane %v952, 2
        %v954 = vmax.f32 %v952, %v953
        %v955 = vrot.slane %v954, 1
        %v956 = vmax.f32 %v954, %v955
        %v957 = vsel %vm711, %v527, -inf
        %v958 = vrot.slane %v957, 4
        %v959 = vmax.f32 %v957, %v958
        %v960 = vrot.slane %v959, 2
        %v961 = vmax.f32 %v959, %v960
        %v962 = vrot.slane %v961, 1
        %v963 = vmax.f32 %v961, %v962
        %v964 = vsel %vm711, %v535, -inf
        %v965 = vrot.slane %v964, 4
        %v966 = vmax.f32 %v964, %v965
        %v967 = vrot.slane %v966, 2
        %v968 = vmax.f32 %v966, %v967
        %v969 = vrot.slane %v968, 1
        %v970 = vmax.f32 %v968, %v969
        %v971 = vsel %vm711, %v543, -inf
        %v972 = vrot.slane %v971, 4
        %v973 = vmax.f32 %v971, %v972
        %v974 = vrot.slane %v973, 2
        %v975 = vmax.f32 %v973, %v974
        %v976 = vrot.slane %v975, 1
        %v977 = vmax.f32 %v975, %v976
        %v978 = vsel %vm711, %v542, -inf
        %v979 = vrot.slane %v978, 4
        %v980 = vmax.f32 %v978, %v979
        %v981 = vrot.slane %v980, 2
        %v982 = vmax.f32 %v980, %v981
        %v983 = vrot.slane %v982, 1
        %v984 = vmax.f32 %v982, %v983
        %v985 = vsel %vm711, %v544, -inf
        %v986 = vrot.slane %v985, 4
        %v987 = vmax.f32 %v985, %v986
        %v988 = vrot.slane %v987, 2
        %v989 = vmax.f32 %v987, %v988
        %v990 = vrot.slane %v989, 1
        %v991 = vmax.f32 %v989, %v990
        %v992 = vsel %vm711, %v552, -inf
        %v993 = vrot.slane %v992, 4
        %v994 = vmax.f32 %v992, %v993
        %v995 = vrot.slane %v994, 2
        %v996 = vmax.f32 %v994, %v995
        %v997 = vrot.slane %v996, 1
        %v998 = vmax.f32 %v996, %v997
        %v999 = vsel %vm711, %v560, -inf
        %v1000 = vrot.slane %v999, 4
        %v1001 = vmax.f32 %v999, %v1000
        %v1002 = vrot.slane %v1001, 2
        %v1003 = vmax.f32 %v1001, %v1002
        %v1004 = vrot.slane %v1003, 1
        %v1005 = vmax.f32 %v1003, %v1004
        %v1006 = vsel %vm711, %v559, -inf
        %v1007 = vrot.slane %v1006, 4
        %v1008 = vmax.f32 %v1006, %v1007
        %v1009 = vrot.slane %v1008, 2
        %v1010 = vmax.f32 %v1008, %v1009
        %v1011 = vrot.slane %v1010, 1
        %v1012 = vmax.f32 %v1010, %v1011
        %v1013 = vsel %vm711, %v561, -inf
        %v1014 = vrot.slane %v1013, 4
        %v1015 = vmax.f32 %v1013, %v1014
        %v1016 = vrot.slane %v1015, 2
        %v1017 = vmax.f32 %v1015, %v1016
        %v1018 = vrot.slane %v1017, 1
        %v1019 = vmax.f32 %v1017, %v1018
        %v1020 = vsel %vm711, %v569, -inf
        %v1021 = vrot.slane %v1020, 4
        %v1022 = vmax.f32 %v1020, %v1021
        %v1023 = vrot.slane %v1022, 2
        %v1024 = vmax.f32 %v1022, %v1023
        %v1025 = vrot.slane %v1024, 1
        %v1026 = vmax.f32 %v1024, %v1025
        %v1027 = vsel %vm711, %v577, -inf
        %v1028 = vrot.slane %v1027, 4
        %v1029 = vmax.f32 %v1027, %v1028
        %v1030 = vrot.slane %v1029, 2
        %v1031 = vmax.f32 %v1029, %v1030
        %v1032 = vrot.slane %v1031, 1
        %v1033 = vmax.f32 %v1031, %v1032
        %v1034 = vsel %vm711, %v576, -inf
        %v1035 = vrot.slane %v1034, 4
        %v1036 = vmax.f32 %v1034, %v1035
        %v1037 = vrot.slane %v1036, 2
        %v1038 = vmax.f32 %v1036, %v1037
        %v1039 = vrot.slane %v1038, 1
        %v1040 = vmax.f32 %v1038, %v1039
        %v1041 = vsel %vm711, %v578, -inf
        %v1042 = vrot.slane %v1041, 4
        %v1043 = vmax.f32 %v1041, %v1042
        %v1044 = vrot.slane %v1043, 2
        %v1045 = vmax.f32 %v1043, %v1044
        %v1046 = vrot.slane %v1045, 1
        %v1047 = vmax.f32 %v1045, %v1046
        %v1048 = vsel %vm711, %v586, -inf
        %v1049 = vrot.slane %v1048, 4
        %v1050 = vmax.f32 %v1048, %v1049
        %v1051 = vrot.slane %v1050, 2
        %v1052 = vmax.f32 %v1050, %v1051
        %v1053 = vrot.slane %v1052, 1
        %v1054 = vmax.f32 %v1052, %v1053
        %v1055 = vsel %vm711, %v594, -inf
        %v1056 = vrot.slane %v1055, 4
        %v1057 = vmax.f32 %v1055, %v1056
        %v1058 = vrot.slane %v1057, 2
        %v1059 = vmax.f32 %v1057, %v1058
        %v1060 = vrot.slane %v1059, 1
        %v1061 = vmax.f32 %v1059, %v1060
        %v1062 = vsel %vm711, %v593, -inf
        %v1063 = vrot.slane %v1062, 4
        %v1064 = vmax.f32 %v1062, %v1063
        %v1065 = vrot.slane %v1064, 2
        %v1066 = vmax.f32 %v1064, %v1065
        %v1067 = vrot.slane %v1066, 1
        %v1068 = vmax.f32 %v1066, %v1067
        %v1069 = vsel %vm711, %v595, -inf
        %v1070 = vrot.slane %v1069, 4
        %v1071 = vmax.f32 %v1069, %v1070
        %v1072 = vrot.slane %v1071, 2
        %v1073 = vmax.f32 %v1071, %v1072
        %v1074 = vrot.slane %v1073, 1
        %v1075 = vmax.f32 %v1073, %v1074
        %v1076 = vsel %vm711, %v603, -inf
        %v1077 = vrot.slane %v1076, 4
        %v1078 = vmax.f32 %v1076, %v1077
        %v1079 = vrot.slane %v1078, 2
        %v1080 = vmax.f32 %v1078, %v1079
        %v1081 = vrot.slane %v1080, 1
        %v1082 = vmax.f32 %v1080, %v1081
        %v1083 = vsel %vm711, %v611, -inf
        %v1084 = vrot.slane %v1083, 4
        %v1085 = vmax.f32 %v1083, %v1084
        %v1086 = vrot.slane %v1085, 2
        %v1087 = vmax.f32 %v1085, %v1086
        %v1088 = vrot.slane %v1087, 1
        %v1089 = vmax.f32 %v1087, %v1088
        %v1090 = vsel %vm711, %v610, -inf
        %v1091 = vrot.slane %v1090, 4
        %v1092 = vmax.f32 %v1090, %v1091
        %v1093 = vrot.slane %v1092, 2
        %v1094 = vmax.f32 %v1092, %v1093
        %v1095 = vrot.slane %v1094, 1
        %v1096 = vmax.f32 %v1094, %v1095
        %v1097 = vsel %vm711, %v612, -inf
        %v1098 = vrot.slane %v1097, 4
        %v1099 = vmax.f32 %v1097, %v1098
        %v1100 = vrot.slane %v1099, 2
        %v1101 = vmax.f32 %v1099, %v1100
        %v1102 = vrot.slane %v1101, 1
        %v1103 = vmax.f32 %v1101, %v1102
        %v1104 = vsel %vm711, %v620, -inf
        %v1105 = vrot.slane %v1104, 4
        %v1106 = vmax.f32 %v1104, %v1105
        %v1107 = vrot.slane %v1106, 2
        %v1108 = vmax.f32 %v1106, %v1107
        %v1109 = vrot.slane %v1108, 1
        %v1110 = vmax.f32 %v1108, %v1109
        %v1111 = vsel %vm711, %v628, -inf
        %v1112 = vrot.slane %v1111, 4
        %v1113 = vmax.f32 %v1111, %v1112
        %v1114 = vrot.slane %v1113, 2
        %v1115 = vmax.f32 %v1113, %v1114
        %v1116 = vrot.slane %v1115, 1
        %v1117 = vmax.f32 %v1115, %v1116
        %v1118 = vsel %vm711, %v627, -inf
        %v1119 = vrot.slane %v1118, 4
        %v1120 = vmax.f32 %v1118, %v1119
        %v1121 = vrot.slane %v1120, 2
        %v1122 = vmax.f32 %v1120, %v1121
        %v1123 = vrot.slane %v1122, 1
        %v1124 = vmax.f32 %v1122, %v1123
        %v1125 = vsel %vm711, %v629, -inf
        %v1126 = vrot.slane %v1125, 4
        %v1127 = vmax.f32 %v1125, %v1126
        %v1128 = vrot.slane %v1127, 2
        %v1129 = vmax.f32 %v1127, %v1128
        %v1130 = vrot.slane %v1129, 1
        %v1131 = vmax.f32 %v1129, %v1130
        %v1132 = vsel %vm711, %v637, -inf
        %v1133 = vrot.slane %v1132, 4
        %v1134 = vmax.f32 %v1132, %v1133
        %v1135 = vrot.slane %v1134, 2
        %v1136 = vmax.f32 %v1134, %v1135
        %v1137 = vrot.slane %v1136, 1
        %v1138 = vmax.f32 %v1136, %v1137
        %v1139 = vsel %vm711, %v645, -inf
        %v1140 = vrot.slane %v1139, 4
        %v1141 = vmax.f32 %v1139, %v1140
        %v1142 = vrot.slane %v1141, 2
        %v1143 = vmax.f32 %v1141, %v1142
        %v1144 = vrot.slane %v1143, 1
        %v1145 = vmax.f32 %v1143, %v1144
        %v1146 = vsel %vm711, %v644, -inf
        %v1147 = vrot.slane %v1146, 4
        %v1148 = vmax.f32 %v1146, %v1147
        %v1149 = vrot.slane %v1148, 2
        %v1150 = vmax.f32 %v1148, %v1149
        %v1151 = vrot.slane %v1150, 1
        %v1152 = vmax.f32 %v1150, %v1151
        %v1153 = vsel %vm711, %v646, -inf
        %v1154 = vrot.slane %v1153, 4
        %v1155 = vmax.f32 %v1153, %v1154
        %v1156 = vrot.slane %v1155, 2
        %v1157 = vmax.f32 %v1155, %v1156
        %v1158 = vrot.slane %v1157, 1
        %v1159 = vmax.f32 %v1157, %v1158
        %1160 = vst.msk [vmem:[#allocation2] sm:$0xff] %vm310, 0.0
        %1161 = vst.msk [vmem:[#allocation2 + $0x8] sm:$0x3] %vm711, 0.0
        %1162 = vst.msk [vmem:[#allocation2 + $0x10] sm:$0xff] %vm310, 0.0
        %1163 = vst.msk [vmem:[#allocation2 + $0x18] sm:$0x3] %vm711, 0.0
        %1164 = vst.msk [vmem:[#allocation2 + $0x20] sm:$0xff] %vm310, 0.0
        %1165 = vst.msk [vmem:[#allocation2 + $0x28] sm:$0x3] %vm711, 0.0
        %1166 = vst.msk [vmem:[#allocation2 + $0x30] sm:$0xff] %vm310, 0.0
        %1167 = vst.msk [vmem:[#allocation2 + $0x38] sm:$0x3] %vm711, 0.0
        %1168 = vst.msk [vmem:[#allocation2 + $0x40] sm:$0xff] %vm310, 0.0
        %1169 = vst.msk [vmem:[#allocation2 + $0x48] sm:$0x3] %vm711, 0.0
        %1170 = vst.msk [vmem:[#allocation2 + $0x50] sm:$0xff] %vm310, 0.0
        %1171 = vst.msk [vmem:[#allocation2 + $0x58] sm:$0x3] %vm711, 0.0
        %1172 = vst.msk [vmem:[#allocation2 + $0x60] sm:$0xff] %vm310, 0.0
        %1173 = vst.msk [vmem:[#allocation2 + $0x68] sm:$0x3] %vm711, 0.0
        %1174 = vst.msk [vmem:[#allocation2 + $0x70] sm:$0xff] %vm310, 0.0
        %1175 = vst.msk [vmem:[#allocation2 + $0x78] sm:$0x3] %vm711, 0.0
        %1176 = vst.msk [vmem:[#allocation2 + $0x80] sm:$0xff] %vm310, 0.0
        %1177 = vst.msk [vmem:[#allocation2 + $0x88] sm:$0x3] %vm711, 0.0
        %1178 = vst.msk [vmem:[#allocation2 + $0x90] sm:$0xff] %vm310, 0.0
        %1179 = vst.msk [vmem:[#allocation2 + $0x98] sm:$0x3] %vm711, 0.0
        %vm1244 = vcmask 1041409
        %v1245 = vsel %vm1244, %v725, %v718
        %vm1246 = vcmask 1042434
        %v1247 = vsel %vm1246, %v732, %v1245
        %vm1248 = vcmask 1043459
        %v1249 = vsel %vm1248, %v739, %v1247
        %vm1250 = vcmask 1044484
        %v1251 = vsel %vm1250, %v746, %v1249
        %vm1252 = vcmask 1045509
        %v1253 = vsel %vm1252, %v753, %v1251
        %vm1254 = vcmask 1046534
        %v1255 = vsel %vm1254, %v760, %v1253
        %vm1256 = vcmask 1047559
        %v1257 = vsel %vm1256, %v767, %v1255
        %v1258 = vsel %vm1244, %v781, %v774
        %v1259 = vsel %vm1246, %v788, %v1258
        %v1260 = vsel %vm1248, %v795, %v1259
        %v1261 = vsel %vm1250, %v802, %v1260
        %v1262 = vsel %vm1252, %v809, %v1261
        %v1263 = vsel %vm1254, %v816, %v1262
        %v1264 = vsel %vm1256, %v823, %v1263
        %v1265 = vsel %vm1244, %v837, %v830
        %v1266 = vsel %vm1246, %v844, %v1265
        %v1267 = vsel %vm1248, %v851, %v1266
        %v1268 = vsel %vm1250, %v858, %v1267
        %v1269 = vsel %vm1252, %v865, %v1268
        %v1270 = vsel %vm1254, %v872, %v1269
        %v1271 = vsel %vm1256, %v879, %v1270
        %v1272 = vsel %vm1244, %v893, %v886
        %v1273 = vsel %vm1246, %v900, %v1272
        %v1274 = vsel %vm1248, %v907, %v1273
        %v1275 = vsel %vm1250, %v914, %v1274
        %v1276 = vsel %vm1252, %v921, %v1275
        %v1277 = vsel %vm1254, %v928, %v1276
        %v1278 = vsel %vm1256, %v935, %v1277
        %v1279 = vsel %vm1244, %v949, %v942
        %v1280 = vsel %vm1246, %v956, %v1279
        %v1281 = vsel %vm1248, %v963, %v1280
        %v1282 = vsel %vm1250, %v970, %v1281
        %v1283 = vsel %vm1252, %v977, %v1282
        %v1284 = vsel %vm1254, %v984, %v1283
        %v1285 = vsel %vm1256, %v991, %v1284
        %v1286 = vsel %vm1244, %v1005, %v998
        %v1287 = vsel %vm1246, %v1012, %v1286
        %v1288 = vsel %vm1248, %v1019, %v1287
        %v1289 = vsel %vm1250, %v1026, %v1288
        %v1290 = vsel %vm1252, %v1033, %v1289
        %v1291 = vsel %vm1254, %v1040, %v1290
        %v1292 = vsel %vm1256, %v1047, %v1291
        %v1293 = vsel %vm1244, %v1061, %v1054
        %v1294 = vsel %vm1246, %v1068, %v1293
        %v1295 = vsel %vm1248, %v1075, %v1294
        %v1296 = vsel %vm1250, %v1082, %v1295
        %v1297 = vsel %vm1252, %v1089, %v1296
        %v1298 = vsel %vm1254, %v1096, %v1297
        %v1299 = vsel %vm1256, %v1103, %v1298
        %v1300 = vsel %vm1244, %v1117, %v1110
        %v1301 = vsel %vm1246, %v1124, %v1300
        %v1302 = vsel %vm1248, %v1131, %v1301
        %v1303 = vsel %vm1250, %v1138, %v1302
        %v1304 = vsel %vm1252, %v1145, %v1303
        %v1305 = vsel %vm1254, %v1152, %v1304
        %v1306 = vsel %vm1256, %v1159, %v1305
        %s1315 = scalar_lea.vmem [#allocation2], 16
        %1316 = vst.msk [vmem:[%s1315 + $0x1] sm:$0xff] %vm310, %v1257
        %1317 = vst.msk [vmem:[%s1315 + $0x11] sm:$0xff] %vm310, %v1264
        %1318 = vst.msk [vmem:[%s1315 + $0x21] sm:$0xff] %vm310, %v1271
        %1319 = vst.msk [vmem:[%s1315 + $0x31] sm:$0xff] %vm310, %v1278
        %1320 = vst.msk [vmem:[%s1315 + $0x41] sm:$0xff] %vm310, %v1285
        %1321 = vst.msk [vmem:[%s1315 + $0x51] sm:$0xff] %vm310, %v1292
        %1322 = vst.msk [vmem:[%s1315 + $0x61] sm:$0xff] %vm310, %v1299
        %1323 = vst.msk [vmem:[%s1315 + $0x71] sm:$0xff] %vm310, %v1306
        %v1324 = vld [vmem:[#allocation2] sm:$0xff]
        %v1325 = vld [vmem:[#allocation2 + $0x10] sm:$0xff]
        %v1326 = vld [vmem:[#allocation2 + $0x20] sm:$0xff]
        %v1327 = vld [vmem:[#allocation2 + $0x30] sm:$0xff]
        %v1328 = vld [vmem:[#allocation2 + $0x40] sm:$0xff]
        %v1329 = vld [vmem:[#allocation2 + $0x50] sm:$0xff]
        %v1330 = vld [vmem:[#allocation2 + $0x60] sm:$0xff]
        %v1331 = vld [vmem:[#allocation2 + $0x70] sm:$0xff]
        %v1332 = vld [vmem:[#allocation2 + $0x1] sm:$0xff]
        %v1333 = vld [vmem:[#allocation2 + $0x11] sm:$0xff]
        %v1334 = vld [vmem:[#allocation2 + $0x21] sm:$0xff]
        %v1335 = vld [vmem:[#allocation2 + $0x31] sm:$0xff]
        %v1336 = vld [vmem:[#allocation2 + $0x41] sm:$0xff]
        %v1337 = vld [vmem:[#allocation2 + $0x51] sm:$0xff]
        %v1338 = vld [vmem:[#allocation2 + $0x61] sm:$0xff]
        %v1339 = vld [vmem:[#allocation2 + $0x71] sm:$0xff]
        %v1340 = vld [vmem:[#allocation2 + $0x2] sm:$0xff]
        %v1341 = vld [vmem:[#allocation2 + $0x12] sm:$0xff]
        %v1342 = vld [vmem:[#allocation2 + $0x22] sm:$0xff]
        %v1343 = vld [vmem:[#allocation2 + $0x32] sm:$0xff]
        %v1344 = vld [vmem:[#allocation2 + $0x42] sm:$0xff]
        %v1345 = vld [vmem:[#allocation2 + $0x52] sm:$0xff]
        %v1346 = vld [vmem:[#allocation2 + $0x62] sm:$0xff]
        %v1347 = vld [vmem:[#allocation2 + $0x72] sm:$0xff]
        %v1348 = vld [vmem:[%s1315] sm:$0xff]
        %v1349 = vld [vmem:[%s1315 + $0x10] sm:$0xff]
        %v1350 = vld [vmem:[%s1315 + $0x20] sm:$0xff]
        %v1351 = vld [vmem:[%s1315 + $0x30] sm:$0xff]
        %v1352 = vld [vmem:[%s1315 + $0x40] sm:$0xff]
        %v1353 = vld [vmem:[%s1315 + $0x50] sm:$0xff]
        %v1354 = vld [vmem:[%s1315 + $0x60] sm:$0xff]
        %v1355 = vld [vmem:[%s1315 + $0x70] sm:$0xff]
        %v1356 = vld [vmem:[%s1315 + $0x1] sm:$0xff]
        %v1357 = vld [vmem:[%s1315 + $0x11] sm:$0xff]
        %v1358 = vld [vmem:[%s1315 + $0x21] sm:$0xff]
        %v1359 = vld [vmem:[%s1315 + $0x31] sm:$0xff]
        %v1360 = vld [vmem:[%s1315 + $0x41] sm:$0xff]
        %v1361 = vld [vmem:[%s1315 + $0x51] sm:$0xff]
        %v1362 = vld [vmem:[%s1315 + $0x61] sm:$0xff]
        %v1363 = vld [vmem:[%s1315 + $0x71] sm:$0xff]
        %v1364 = vld [vmem:[%s1315 + $0x2] sm:$0xff]
        %v1365 = vld [vmem:[%s1315 + $0x12] sm:$0xff]
        %v1366 = vld [vmem:[%s1315 + $0x22] sm:$0xff]
        %v1367 = vld [vmem:[%s1315 + $0x32] sm:$0xff]
        %v1368 = vld [vmem:[%s1315 + $0x42] sm:$0xff]
        %v1369 = vld [vmem:[%s1315 + $0x52] sm:$0xff]
        %v1370 = vld [vmem:[%s1315 + $0x62] sm:$0xff]
        %v1371 = vld [vmem:[%s1315 + $0x72] sm:$0xff]
        %s1372 = scalar_lea.vmem [#allocation2], 32
        %v1373 = vld [vmem:[%s1372] sm:$0xff]
        %v1374 = vld [vmem:[%s1372 + $0x10] sm:$0xff]
        %v1375 = vld [vmem:[%s1372 + $0x20] sm:$0xff]
        %v1376 = vld [vmem:[%s1372 + $0x30] sm:$0xff]
        %v1377 = vld [vmem:[%s1372 + $0x40] sm:$0xff]
        %v1378 = vld [vmem:[%s1372 + $0x50] sm:$0xff]
        %v1379 = vld [vmem:[%s1372 + $0x60] sm:$0xff]
        %v1380 = vld [vmem:[%s1372 + $0x70] sm:$0xff]
        %v1381 = vld [vmem:[%s1372 + $0x1] sm:$0xff]
        %v1382 = vld [vmem:[%s1372 + $0x11] sm:$0xff]
        %v1383 = vld [vmem:[%s1372 + $0x21] sm:$0xff]
        %v1384 = vld [vmem:[%s1372 + $0x31] sm:$0xff]
        %v1385 = vld [vmem:[%s1372 + $0x41] sm:$0xff]
        %v1386 = vld [vmem:[%s1372 + $0x51] sm:$0xff]
        %v1387 = vld [vmem:[%s1372 + $0x61] sm:$0xff]
        %v1388 = vld [vmem:[%s1372 + $0x71] sm:$0xff]
        %v1389 = vld [vmem:[%s1372 + $0x2] sm:$0xff]
        %v1390 = vld [vmem:[%s1372 + $0x12] sm:$0xff]
        %v1391 = vld [vmem:[%s1372 + $0x22] sm:$0xff]
        %v1392 = vld [vmem:[%s1372 + $0x32] sm:$0xff]
        %v1393 = vld [vmem:[%s1372 + $0x42] sm:$0xff]
        %v1394 = vld [vmem:[%s1372 + $0x52] sm:$0xff]
        %v1395 = vld [vmem:[%s1372 + $0x62] sm:$0xff]
        %v1396 = vld [vmem:[%s1372 + $0x72] sm:$0xff]
        %1405 = vrot.lane.b32.xlu0 %v1332, 4
        %v1406 = vpop.permute.xlu0 %1405
        %1407 = vrot.lane.b32.xlu0 %v1333, 4
        %v1408 = vpop.permute.xlu0 %1407
        %1409 = vrot.lane.b32.xlu0 %v1334, 4
        %v1410 = vpop.permute.xlu0 %1409
        %1411 = vrot.lane.b32.xlu0 %v1335, 4
        %v1412 = vpop.permute.xlu0 %1411
        %1413 = vrot.lane.b32.xlu0 %v1336, 4
        %v1414 = vpop.permute.xlu0 %1413
        %1415 = vrot.lane.b32.xlu0 %v1337, 4
        %v1416 = vpop.permute.xlu0 %1415
        %1417 = vrot.lane.b32.xlu0 %v1338, 4
        %v1418 = vpop.permute.xlu0 %1417
        %1419 = vrot.lane.b32.xlu0 %v1339, 4
        %v1420 = vpop.permute.xlu0 %1419
        %1437 = vrot.lane.b32.xlu0 %v1340, 8
        %v1438 = vpop.permute.xlu0 %1437
        %1439 = vrot.lane.b32.xlu0 %v1341, 8
        %v1440 = vpop.permute.xlu0 %1439
        %1441 = vrot.lane.b32.xlu0 %v1342, 8
        %v1442 = vpop.permute.xlu0 %1441
        %1443 = vrot.lane.b32.xlu0 %v1343, 8
        %v1444 = vpop.permute.xlu0 %1443
        %1445 = vrot.lane.b32.xlu0 %v1344, 8
        %v1446 = vpop.permute.xlu0 %1445
        %1447 = vrot.lane.b32.xlu0 %v1345, 8
        %v1448 = vpop.permute.xlu0 %1447
        %1449 = vrot.lane.b32.xlu0 %v1346, 8
        %v1450 = vpop.permute.xlu0 %1449
        %1451 = vrot.lane.b32.xlu0 %v1347, 8
        %v1452 = vpop.permute.xlu0 %1451
        %1469 = vrot.lane.b32.xlu0 %v1348, 12
        %v1470 = vpop.permute.xlu0 %1469
        %1471 = vrot.lane.b32.xlu0 %v1349, 12
        %v1472 = vpop.permute.xlu0 %1471
        %1473 = vrot.lane.b32.xlu0 %v1350, 12
        %v1474 = vpop.permute.xlu0 %1473
        %1475 = vrot.lane.b32.xlu0 %v1351, 12
        %v1476 = vpop.permute.xlu0 %1475
        %1477 = vrot.lane.b32.xlu0 %v1352, 12
        %v1478 = vpop.permute.xlu0 %1477
        %1479 = vrot.lane.b32.xlu0 %v1353, 12
        %v1480 = vpop.permute.xlu0 %1479
        %1481 = vrot.lane.b32.xlu0 %v1354, 12
        %v1482 = vpop.permute.xlu0 %1481
        %1483 = vrot.lane.b32.xlu0 %v1355, 12
        %v1484 = vpop.permute.xlu0 %1483
        %1501 = vrot.lane.b32.xlu0 %v1356, 16
        %v1502 = vpop.permute.xlu0 %1501
        %1503 = vrot.lane.b32.xlu0 %v1357, 16
        %v1504 = vpop.permute.xlu0 %1503
        %1505 = vrot.lane.b32.xlu0 %v1358, 16
        %v1506 = vpop.permute.xlu0 %1505
        %1507 = vrot.lane.b32.xlu0 %v1359, 16
        %v1508 = vpop.permute.xlu0 %1507
        %1509 = vrot.lane.b32.xlu0 %v1360, 16
        %v1510 = vpop.permute.xlu0 %1509
        %1511 = vrot.lane.b32.xlu0 %v1361, 16
        %v1512 = vpop.permute.xlu0 %1511
        %1513 = vrot.lane.b32.xlu0 %v1362, 16
        %v1514 = vpop.permute.xlu0 %1513
        %1515 = vrot.lane.b32.xlu0 %v1363, 16
        %v1516 = vpop.permute.xlu0 %1515
        %1533 = vrot.lane.b32.xlu0 %v1364, 20
        %v1534 = vpop.permute.xlu0 %1533
        %1535 = vrot.lane.b32.xlu0 %v1365, 20
        %v1536 = vpop.permute.xlu0 %1535
        %1537 = vrot.lane.b32.xlu0 %v1366, 20
        %v1538 = vpop.permute.xlu0 %1537
        %1539 = vrot.lane.b32.xlu0 %v1367, 20
        %v1540 = vpop.permute.xlu0 %1539
        %1541 = vrot.lane.b32.xlu0 %v1368, 20
        %v1542 = vpop.permute.xlu0 %1541
        %1543 = vrot.lane.b32.xlu0 %v1369, 20
        %v1544 = vpop.permute.xlu0 %1543
        %1545 = vrot.lane.b32.xlu0 %v1370, 20
        %v1546 = vpop.permute.xlu0 %1545
        %1547 = vrot.lane.b32.xlu0 %v1371, 20
        %v1548 = vpop.permute.xlu0 %1547
        %1565 = vrot.lane.b32.xlu0 %v1373, 24
        %v1566 = vpop.permute.xlu0 %1565
        %1567 = vrot.lane.b32.xlu0 %v1374, 24
        %v1568 = vpop.permute.xlu0 %1567
        %1569 = vrot.lane.b32.xlu0 %v1375, 24
        %v1570 = vpop.permute.xlu0 %1569
        %1571 = vrot.lane.b32.xlu0 %v1376, 24
        %v1572 = vpop.permute.xlu0 %1571
        %1573 = vrot.lane.b32.xlu0 %v1377, 24
        %v1574 = vpop.permute.xlu0 %1573
        %1575 = vrot.lane.b32.xlu0 %v1378, 24
        %v1576 = vpop.permute.xlu0 %1575
        %1577 = vrot.lane.b32.xlu0 %v1379, 24
        %v1578 = vpop.permute.xlu0 %1577
        %1579 = vrot.lane.b32.xlu0 %v1380, 24
        %v1580 = vpop.permute.xlu0 %1579
        %1597 = vrot.lane.b32.xlu0 %v1381, 28
        %v1598 = vpop.permute.xlu0 %1597
        %1599 = vrot.lane.b32.xlu0 %v1382, 28
        %v1600 = vpop.permute.xlu0 %1599
        %1601 = vrot.lane.b32.xlu0 %v1383, 28
        %v1602 = vpop.permute.xlu0 %1601
        %1603 = vrot.lane.b32.xlu0 %v1384, 28
        %v1604 = vpop.permute.xlu0 %1603
        %1605 = vrot.lane.b32.xlu0 %v1385, 28
        %v1606 = vpop.permute.xlu0 %1605
        %1607 = vrot.lane.b32.xlu0 %v1386, 28
        %v1608 = vpop.permute.xlu0 %1607
        %1609 = vrot.lane.b32.xlu0 %v1387, 28
        %v1610 = vpop.permute.xlu0 %1609
        %1611 = vrot.lane.b32.xlu0 %v1388, 28
        %v1612 = vpop.permute.xlu0 %1611
        %1629 = vrot.lane.b32.xlu0 %v1389, 32
        %v1630 = vpop.permute.xlu0 %1629
        %1631 = vrot.lane.b32.xlu0 %v1390, 32
        %v1632 = vpop.permute.xlu0 %1631
        %1633 = vrot.lane.b32.xlu0 %v1391, 32
        %v1634 = vpop.permute.xlu0 %1633
        %1635 = vrot.lane.b32.xlu0 %v1392, 32
        %v1636 = vpop.permute.xlu0 %1635
        %1637 = vrot.lane.b32.xlu0 %v1393, 32
        %v1638 = vpop.permute.xlu0 %1637
        %1639 = vrot.lane.b32.xlu0 %v1394, 32
        %v1640 = vpop.permute.xlu0 %1639
        %1641 = vrot.lane.b32.xlu0 %v1395, 32
        %v1642 = vpop.permute.xlu0 %1641
        %1643 = vrot.lane.b32.xlu0 %v1396, 32
        %v1644 = vpop.permute.xlu0 %1643
        %v1653 = vsel %vm310, %v1324, %v1406
        %v1654 = vsel %vm310, %v1325, %v1408
        %v1655 = vsel %vm310, %v1326, %v1410
        %v1656 = vsel %vm310, %v1327, %v1412
        %v1657 = vsel %vm310, %v1328, %v1414
        %v1658 = vsel %vm310, %v1329, %v1416
        %v1659 = vsel %vm310, %v1330, %v1418
        %v1660 = vsel %vm310, %v1331, %v1420
        %vm1661 = vcmask 64512
        %v1662 = vsel %vm1661, %v1653, %v1438
        %v1663 = vsel %vm1661, %v1654, %v1440
        %v1664 = vsel %vm1661, %v1655, %v1442
        %v1665 = vsel %vm1661, %v1656, %v1444
        %v1666 = vsel %vm1661, %v1657, %v1446
        %v1667 = vsel %vm1661, %v1658, %v1448
        %v1668 = vsel %vm1661, %v1659, %v1450
        %v1669 = vsel %vm1661, %v1660, %v1452
        %vm1670 = vcmask 97280
        %v1671 = vsel %vm1670, %v1662, %v1470
        %v1672 = vsel %vm1670, %v1663, %v1472
        %v1673 = vsel %vm1670, %v1664, %v1474
        %v1674 = vsel %vm1670, %v1665, %v1476
        %v1675 = vsel %vm1670, %v1666, %v1478
        %v1676 = vsel %vm1670, %v1667, %v1480
        %v1677 = vsel %vm1670, %v1668, %v1482
        %v1678 = vsel %vm1670, %v1669, %v1484
        %vm1679 = vcmask 130048
        %v1680 = vsel %vm1679, %v1671, %v1502
        %v1681 = vsel %vm1679, %v1672, %v1504
        %v1682 = vsel %vm1679, %v1673, %v1506
        %v1683 = vsel %vm1679, %v1674, %v1508
        %v1684 = vsel %vm1679, %v1675, %v1510
        %v1685 = vsel %vm1679, %v1676, %v1512
        %v1686 = vsel %vm1679, %v1677, %v1514
        %v1687 = vsel %vm1679, %v1678, %v1516
        %vm1688 = vcmask 162816
        %v1689 = vsel %vm1688, %v1680, %v1534
        %v1690 = vsel %vm1688, %v1681, %v1536
        %v1691 = vsel %vm1688, %v1682, %v1538
        %v1692 = vsel %vm1688, %v1683, %v1540
        %v1693 = vsel %vm1688, %v1684, %v1542
        %v1694 = vsel %vm1688, %v1685, %v1544
        %v1695 = vsel %vm1688, %v1686, %v1546
        %v1696 = vsel %vm1688, %v1687, %v1548
        %vm1697 = vcmask 195584
        %v1698 = vsel %vm1697, %v1689, %v1566
        %v1699 = vsel %vm1697, %v1690, %v1568
        %v1700 = vsel %vm1697, %v1691, %v1570
        %v1701 = vsel %vm1697, %v1692, %v1572
        %v1702 = vsel %vm1697, %v1693, %v1574
        %v1703 = vsel %vm1697, %v1694, %v1576
        %v1704 = vsel %vm1697, %v1695, %v1578
        %v1705 = vsel %vm1697, %v1696, %v1580
        %vm1706 = vcmask 228352
        %v1707 = vsel %vm1706, %v1698, %v1598
        %v1708 = vsel %vm1706, %v1699, %v1600
        %v1709 = vsel %vm1706, %v1700, %v1602
        %v1710 = vsel %vm1706, %v1701, %v1604
        %v1711 = vsel %vm1706, %v1702, %v1606
        %v1712 = vsel %vm1706, %v1703, %v1608
        %v1713 = vsel %vm1706, %v1704, %v1610
        %v1714 = vsel %vm1706, %v1705, %v1612
        %vm1715 = vcmask 261120
        %v1716 = vsel %vm1715, %v1707, %v1630
        %v1717 = vsel %vm1715, %v1708, %v1632
        %v1718 = vsel %vm1715, %v1709, %v1634
        %v1719 = vsel %vm1715, %v1710, %v1636
        %v1720 = vsel %vm1715, %v1711, %v1638
        %v1721 = vsel %vm1715, %v1712, %v1640
        %v1722 = vsel %vm1715, %v1713, %v1642
        %v1723 = vsel %vm1715, %v1714, %v1644
        %v1724 = vpack.c.bf16 %v1717, %v1716
        %v1725 = vpack.c.bf16 %v1719, %v1718
        %v1726 = vpack.c.bf16 %v1721, %v1720
        %v1727 = vpack.c.bf16 %v1723, %v1722
        %v1728 = vld [vmem:[%s1] sm:$0xf]
        %v1729 = vld [vmem:[%s1 + $0x4] sm:$0xf]
        %v1730 = vld [vmem:[%s1 + $0x8] sm:$0xf]
        %v1731 = vld [vmem:[%s1 + $0xc] sm:$0xf]
        %v1732 = vld [vmem:[%s1 + $0x10] sm:$0x3]
        %v1738 = vunpack.c.l.b16 %v1728
        %v1739 = vunpack.c.l.b16 %v1729
        %v1740 = vunpack.c.l.b16 %v1730
        %v1741 = vunpack.c.l.b16 %v1731
        %v1742 = vunpack.c.l.b16 %v1732
        %v1743 = vpack.c.b16 %v1739, %v1738
        %v1744 = vpack.c.b16 %v1741, %v1740
        %v1745 = vpack.c.b16 %v1742, %v1742
        %vm1748 = vcmask 293888
        %v1750 = vsel %vm1748, %v1724, 0
        %v1753 = vsel %vm1748, %v1725, 0
        %v1756 = vsel %vm1748, %v1726, 0
        %v1759 = vsel %vm1748, %v1727, 0
        %vm1761 = vcmask 1041408
        %v1763 = vsel %vm1761, %v1745, 0
        %1765 = vmatprep.subr.bf16.mxu0 0
        %1766 = vmatpush1.bf16.msra.mxu0 %v1743
        %1767 = vmatprep.subr.bf16.mxu0 0
        %1768 = vmatpush1.bf16.msra.mxu0 %v1744
        %1769 = vmatprep.subr.bf16.mxu0 0
        %1770 = vmatpush1.bf16.msra.mxu0 %v1763
        %1771 = vmatprep.subr.bf16.mxu0 0
        %1772 = vmatpush1.bf16.msra.mxu0 0
        %1773 = vmatprep.subr.bf16.mxu0 0
        %1774 = vmatpush1.bf16.msra.mxu0 0
        %1775 = vmatprep.subr.bf16.mxu0 0
        %1776 = vmatpush1.bf16.msra.mxu0 0
        %1777 = vmatprep.subr.bf16.mxu0 0
        %1778 = vmatpush1.bf16.msra.mxu0 0
        %1779 = vmatprep.subr.bf16.mxu0 0
        %1780 = vmatpush1.bf16.msra.mxu0 0
        %1781 = vmatprep.subr.bf16.mxu0 0
        %1782 = vmatpush1.bf16.msra.mxu0 0
        %1783 = vmatprep.subr.bf16.mxu0 0
        %1784 = vmatpush1.bf16.msra.mxu0 0
        %1785 = vmatprep.subr.bf16.mxu0 0
        %1786 = vmatpush1.bf16.msra.mxu0 0
        %1787 = vmatprep.subr.bf16.mxu0 0
        %1788 = vmatpush1.bf16.msra.mxu0 0
        %1789 = vmatprep.subr.bf16.mxu0 0
        %1790 = vmatpush1.bf16.msra.mxu0 0
        %1791 = vmatprep.subr.bf16.mxu0 0
        %1792 = vmatpush1.bf16.msra.mxu0 0
        %1793 = vmatprep.subr.bf16.mxu0 0
        %1794 = vmatpush1.bf16.msra.mxu0 0
        %1795 = vmatprep.subr.bf16.mxu0 0
        %1796 = vmatpush1.bf16.msra.mxu0 0
        %1797 = vmatprep.mubr.bf16.mxu0 0
        %1798 = vmatmul.mubr.bf16.gmra.mrb[0].mxu0 %v1750
        %v1799 = vpop.f32.mrb[0].mxu0
        %v1800 = vadd.f32 0.0, %v1799
        %v1801 = vpop.f32.mrb[0].mxu0
        %v1802 = vpop.f32.mrb[0].mxu0
        %v1803 = vadd.f32 0.0, %v1802
        %v1804 = vpop.f32.mrb[0].mxu0
        %1805 = vmatprep.mubr.bf16.mxu0 0
        %1806 = vmatmul.mubr.bf16.gmra.mrb[0].mxu0 %v1753
        %v1807 = vpop.f32.mrb[0].mxu0
        %v1808 = vadd.f32 0.0, %v1807
        %v1809 = vpop.f32.mrb[0].mxu0
        %v1810 = vpop.f32.mrb[0].mxu0
        %v1811 = vadd.f32 0.0, %v1810
        %v1812 = vpop.f32.mrb[0].mxu0
        %1813 = vmatprep.mubr.bf16.mxu0 0
        %1814 = vmatmul.mubr.bf16.gmra.mrb[0].mxu0 %v1756
        %v1815 = vpop.f32.mrb[0].mxu0
        %v1816 = vadd.f32 0.0, %v1815
        %v1817 = vpop.f32.mrb[0].mxu0
        %v1818 = vpop.f32.mrb[0].mxu0
        %v1819 = vadd.f32 0.0, %v1818
        %v1820 = vpop.f32.mrb[0].mxu0
        %1821 = vmatprep.mubr.bf16.mxu0 0
        %1822 = vmatmul.mubr.bf16.gmra.mrb[0].mxu0 %v1759
        %v1823 = vpop.f32.mrb[0].mxu0
        %v1824 = vadd.f32 0.0, %v1823
        %v1825 = vpop.f32.mrb[0].mxu0
        %v1826 = vpop.f32.mrb[0].mxu0
        %v1827 = vadd.f32 0.0, %v1826
        %v1828 = vpop.f32.mrb[0].mxu0
        %1829 = vdwg.mxu0
        %v1830 = vld [vmem:[%s2] sm:$0x1]
        %v1832 = vlaneseq
        %v1833 = vshrl.u32 %v1832, 7
        %v1834 = vsub.s32 0, %v1833
        %v1835 = vrot.slane %v1830, %v1834
        %v1837 = vmul.f32 %v1800, %v1835
        %v1838 = vmul.f32 %v1803, %v1835
        %v1839 = vmul.f32 %v1808, %v1835
        %v1840 = vmul.f32 %v1811, %v1835
        %v1841 = vmul.f32 %v1816, %v1835
        %v1842 = vmul.f32 %v1819, %v1835
        %v1843 = vmul.f32 %v1824, %v1835
        %v1844 = vmul.f32 %v1827, %v1835
        %v1845 = vld [vmem:[%s3] sm:$0x1]
        %v1847 = vlaneseq
        %v1848 = vshrl.u32 %v1847, 7
        %v1849 = vsub.s32 0, %v1848
        %v1850 = vrot.slane %v1845, %v1849
        %v1852 = vadd.f32 %v1837, %v1850
        %v1853 = vadd.f32 %v1838, %v1850
        %v1854 = vadd.f32 %v1839, %v1850
        %v1855 = vadd.f32 %v1840, %v1850
        %v1856 = vadd.f32 %v1841, %v1850
        %v1857 = vadd.f32 %v1842, %v1850
        %v1858 = vadd.f32 %v1843, %v1850
        %v1859 = vadd.f32 %v1844, %v1850
        %v1860 = vmax.f32 %v1852, 0.0
        %v1861 = vmax.f32 %v1853, 0.0
        %v1862 = vmax.f32 %v1854, 0.0
        %v1863 = vmax.f32 %v1855, 0.0
        %v1864 = vmax.f32 %v1856, 0.0
        %v1865 = vmax.f32 %v1857, 0.0
        %v1866 = vmax.f32 %v1858, 0.0
        %v1867 = vmax.f32 %v1859, 0.0
        %1868 = vst.msk [vmem:[#allocation3] sm:$0xff] %vm1661, 0.0
        %vm1869 = vcmask 58368
        %1870 = vst.msk [vmem:[#allocation3 + $0x8] sm:$0x3] %vm1869, 0.0
        %1871 = vst.msk [vmem:[#allocation3 + $0x10] sm:$0xff] %vm1661, 0.0
        %1872 = vst.msk [vmem:[#allocation3 + $0x18] sm:$0x3] %vm1869, 0.0
        %1873 = vst.msk [vmem:[#allocation3 + $0x20] sm:$0xff] %vm1661, 0.0
        %1874 = vst.msk [vmem:[#allocation3 + $0x28] sm:$0x3] %vm1869, 0.0
        %1875 = vst.msk [vmem:[#allocation3 + $0x30] sm:$0xff] %vm1661, 0.0
        %1876 = vst.msk [vmem:[#allocation3 + $0x38] sm:$0x3] %vm1869, 0.0
        %1877 = vst.msk [vmem:[#allocation3 + $0x40] sm:$0xff] %vm1661, 0.0
        %1878 = vst.msk [vmem:[#allocation3 + $0x48] sm:$0x3] %vm1869, 0.0
        %1879 = vst.msk [vmem:[#allocation3 + $0x50] sm:$0xff] %vm1661, 0.0
        %1880 = vst.msk [vmem:[#allocation3 + $0x58] sm:$0x3] %vm1869, 0.0
        %1881 = vst.msk [vmem:[#allocation3 + $0x60] sm:$0xff] %vm1661, 0.0
        %1882 = vst.msk [vmem:[#allocation3 + $0x68] sm:$0x3] %vm1869, 0.0
        %1883 = vst.msk [vmem:[#allocation3 + $0x70] sm:$0xff] %vm1661, 0.0
        %1884 = vst.msk [vmem:[#allocation3 + $0x78] sm:$0x3] %vm1869, 0.0
        %1885 = vst.msk [vmem:[#allocation3 + $0x80] sm:$0xff] %vm1661, 0.0
        %1886 = vst.msk [vmem:[#allocation3 + $0x88] sm:$0x3] %vm1869, 0.0
        %1887 = vst.msk [vmem:[#allocation3 + $0x90] sm:$0xff] %vm1661, 0.0
        %1888 = vst.msk [vmem:[#allocation3 + $0x98] sm:$0x3] %vm1869, 0.0
        %s1889 = scalar_lea.vmem [#allocation3], 16
        %1890 = vst.msk [vmem:[%s1889 + $0x1] sm:$0xff] %vm1661, %v1860
        %1891 = vst.msk [vmem:[%s1889 + $0x11] sm:$0xff] %vm1661, %v1861
        %1892 = vst.msk [vmem:[%s1889 + $0x21] sm:$0xff] %vm1661, %v1862
        %1893 = vst.msk [vmem:[%s1889 + $0x31] sm:$0xff] %vm1661, %v1863
        %1894 = vst.msk [vmem:[%s1889 + $0x41] sm:$0xff] %vm1661, %v1864
        %1895 = vst.msk [vmem:[%s1889 + $0x51] sm:$0xff] %vm1661, %v1865
        %1896 = vst.msk [vmem:[%s1889 + $0x61] sm:$0xff] %vm1661, %v1866
        %1897 = vst.msk [vmem:[%s1889 + $0x71] sm:$0xff] %vm1661, %v1867
        %v1898 = vld [vmem:[#allocation3] sm:$0xff]
        %v1899 = vld [vmem:[#allocation3 + $0x10] sm:$0xff]
        %v1900 = vld [vmem:[#allocation3 + $0x20] sm:$0xff]
        %v1901 = vld [vmem:[#allocation3 + $0x30] sm:$0xff]
        %v1902 = vld [vmem:[#allocation3 + $0x40] sm:$0xff]
        %v1903 = vld [vmem:[#allocation3 + $0x50] sm:$0xff]
        %v1904 = vld [vmem:[#allocation3 + $0x60] sm:$0xff]
        %v1905 = vld [vmem:[#allocation3 + $0x70] sm:$0xff]
        %v1906 = vld [vmem:[#allocation3 + $0x1] sm:$0xff]
        %v1907 = vld [vmem:[#allocation3 + $0x11] sm:$0xff]
        %v1908 = vld [vmem:[#allocation3 + $0x21] sm:$0xff]
        %v1909 = vld [vmem:[#allocation3 + $0x31] sm:$0xff]
        %v1910 = vld [vmem:[#allocation3 + $0x41] sm:$0xff]
        %v1911 = vld [vmem:[#allocation3 + $0x51] sm:$0xff]
        %v1912 = vld [vmem:[#allocation3 + $0x61] sm:$0xff]
        %v1913 = vld [vmem:[#allocation3 + $0x71] sm:$0xff]
        %v1914 = vld [vmem:[#allocation3 + $0x2] sm:$0xff]
        %v1915 = vld [vmem:[#allocation3 + $0x12] sm:$0xff]
        %v1916 = vld [vmem:[#allocation3 + $0x22] sm:$0xff]
        %v1917 = vld [vmem:[#allocation3 + $0x32] sm:$0xff]
        %v1918 = vld [vmem:[#allocation3 + $0x42] sm:$0xff]
        %v1919 = vld [vmem:[#allocation3 + $0x52] sm:$0xff]
        %v1920 = vld [vmem:[#allocation3 + $0x62] sm:$0xff]
        %v1921 = vld [vmem:[#allocation3 + $0x72] sm:$0xff]
        %v1922 = vld [vmem:[%s1889] sm:$0xff]
        %v1923 = vld [vmem:[%s1889 + $0x10] sm:$0xff]
        %v1924 = vld [vmem:[%s1889 + $0x20] sm:$0xff]
        %v1925 = vld [vmem:[%s1889 + $0x30] sm:$0xff]
        %v1926 = vld [vmem:[%s1889 + $0x40] sm:$0xff]
        %v1927 = vld [vmem:[%s1889 + $0x50] sm:$0xff]
        %v1928 = vld [vmem:[%s1889 + $0x60] sm:$0xff]
        %v1929 = vld [vmem:[%s1889 + $0x70] sm:$0xff]
        %v1930 = vld [vmem:[%s1889 + $0x1] sm:$0xff]
        %v1931 = vld [vmem:[%s1889 + $0x11] sm:$0xff]
        %v1932 = vld [vmem:[%s1889 + $0x21] sm:$0xff]
        %v1933 = vld [vmem:[%s1889 + $0x31] sm:$0xff]
        %v1934 = vld [vmem:[%s1889 + $0x41] sm:$0xff]
        %v1935 = vld [vmem:[%s1889 + $0x51] sm:$0xff]
        %v1936 = vld [vmem:[%s1889 + $0x61] sm:$0xff]
        %v1937 = vld [vmem:[%s1889 + $0x71] sm:$0xff]
        %v1938 = vld [vmem:[%s1889 + $0x2] sm:$0xff]
        %v1939 = vld [vmem:[%s1889 + $0x12] sm:$0xff]
        %v1940 = vld [vmem:[%s1889 + $0x22] sm:$0xff]
        %v1941 = vld [vmem:[%s1889 + $0x32] sm:$0xff]
        %v1942 = vld [vmem:[%s1889 + $0x42] sm:$0xff]
        %v1943 = vld [vmem:[%s1889 + $0x52] sm:$0xff]
        %v1944 = vld [vmem:[%s1889 + $0x62] sm:$0xff]
        %v1945 = vld [vmem:[%s1889 + $0x72] sm:$0xff]
        %s1946 = scalar_lea.vmem [#allocation3], 32
        %v1947 = vld [vmem:[%s1946] sm:$0xff]
        %v1948 = vld [vmem:[%s1946 + $0x10] sm:$0xff]
        %v1949 = vld [vmem:[%s1946 + $0x20] sm:$0xff]
        %v1950 = vld [vmem:[%s1946 + $0x30] sm:$0xff]
        %v1951 = vld [vmem:[%s1946 + $0x40] sm:$0xff]
        %v1952 = vld [vmem:[%s1946 + $0x50] sm:$0xff]
        %v1953 = vld [vmem:[%s1946 + $0x60] sm:$0xff]
        %v1954 = vld [vmem:[%s1946 + $0x70] sm:$0xff]
        %v1955 = vld [vmem:[%s1946 + $0x1] sm:$0xff]
        %v1956 = vld [vmem:[%s1946 + $0x11] sm:$0xff]
        %v1957 = vld [vmem:[%s1946 + $0x21] sm:$0xff]
        %v1958 = vld [vmem:[%s1946 + $0x31] sm:$0xff]
        %v1959 = vld [vmem:[%s1946 + $0x41] sm:$0xff]
        %v1960 = vld [vmem:[%s1946 + $0x51] sm:$0xff]
        %v1961 = vld [vmem:[%s1946 + $0x61] sm:$0xff]
        %v1962 = vld [vmem:[%s1946 + $0x71] sm:$0xff]
        %v1963 = vld [vmem:[%s1946 + $0x2] sm:$0xff]
        %v1964 = vld [vmem:[%s1946 + $0x12] sm:$0xff]
        %v1965 = vld [vmem:[%s1946 + $0x22] sm:$0xff]
        %v1966 = vld [vmem:[%s1946 + $0x32] sm:$0xff]
        %v1967 = vld [vmem:[%s1946 + $0x42] sm:$0xff]
        %v1968 = vld [vmem:[%s1946 + $0x52] sm:$0xff]
        %v1969 = vld [vmem:[%s1946 + $0x62] sm:$0xff]
        %v1970 = vld [vmem:[%s1946 + $0x72] sm:$0xff]
        %1979 = vrot.lane.b32.xlu0 %v1906, 8
        %v1980 = vpop.permute.xlu0 %1979
        %1981 = vrot.lane.b32.xlu0 %v1907, 8
        %v1982 = vpop.permute.xlu0 %1981
        %1983 = vrot.lane.b32.xlu0 %v1908, 8
        %v1984 = vpop.permute.xlu0 %1983
        %1985 = vrot.lane.b32.xlu0 %v1909, 8
        %v1986 = vpop.permute.xlu0 %1985
        %1987 = vrot.lane.b32.xlu0 %v1910, 8
        %v1988 = vpop.permute.xlu0 %1987
        %1989 = vrot.lane.b32.xlu0 %v1911, 8
        %v1990 = vpop.permute.xlu0 %1989
        %1991 = vrot.lane.b32.xlu0 %v1912, 8
        %v1992 = vpop.permute.xlu0 %1991
        %1993 = vrot.lane.b32.xlu0 %v1913, 8
        %v1994 = vpop.permute.xlu0 %1993
        %2011 = vrot.lane.b32.xlu0 %v1914, 16
        %v2012 = vpop.permute.xlu0 %2011
        %2013 = vrot.lane.b32.xlu0 %v1915, 16
        %v2014 = vpop.permute.xlu0 %2013
        %2015 = vrot.lane.b32.xlu0 %v1916, 16
        %v2016 = vpop.permute.xlu0 %2015
        %2017 = vrot.lane.b32.xlu0 %v1917, 16
        %v2018 = vpop.permute.xlu0 %2017
        %2019 = vrot.lane.b32.xlu0 %v1918, 16
        %v2020 = vpop.permute.xlu0 %2019
        %2021 = vrot.lane.b32.xlu0 %v1919, 16
        %v2022 = vpop.permute.xlu0 %2021
        %2023 = vrot.lane.b32.xlu0 %v1920, 16
        %v2024 = vpop.permute.xlu0 %2023
        %2025 = vrot.lane.b32.xlu0 %v1921, 16
        %v2026 = vpop.permute.xlu0 %2025
        %2043 = vrot.lane.b32.xlu0 %v1922, 24
        %v2044 = vpop.permute.xlu0 %2043
        %2045 = vrot.lane.b32.xlu0 %v1923, 24
        %v2046 = vpop.permute.xlu0 %2045
        %2047 = vrot.lane.b32.xlu0 %v1924, 24
        %v2048 = vpop.permute.xlu0 %2047
        %2049 = vrot.lane.b32.xlu0 %v1925, 24
        %v2050 = vpop.permute.xlu0 %2049
        %2051 = vrot.lane.b32.xlu0 %v1926, 24
        %v2052 = vpop.permute.xlu0 %2051
        %2053 = vrot.lane.b32.xlu0 %v1927, 24
        %v2054 = vpop.permute.xlu0 %2053
        %2055 = vrot.lane.b32.xlu0 %v1928, 24
        %v2056 = vpop.permute.xlu0 %2055
        %2057 = vrot.lane.b32.xlu0 %v1929, 24
        %v2058 = vpop.permute.xlu0 %2057
        %2075 = vrot.lane.b32.xlu0 %v1930, 32
        %v2076 = vpop.permute.xlu0 %2075
        %2077 = vrot.lane.b32.xlu0 %v1931, 32
        %v2078 = vpop.permute.xlu0 %2077
        %2079 = vrot.lane.b32.xlu0 %v1932, 32
        %v2080 = vpop.permute.xlu0 %2079
        %2081 = vrot.lane.b32.xlu0 %v1933, 32
        %v2082 = vpop.permute.xlu0 %2081
        %2083 = vrot.lane.b32.xlu0 %v1934, 32
        %v2084 = vpop.permute.xlu0 %2083
        %2085 = vrot.lane.b32.xlu0 %v1935, 32
        %v2086 = vpop.permute.xlu0 %2085
        %2087 = vrot.lane.b32.xlu0 %v1936, 32
        %v2088 = vpop.permute.xlu0 %2087
        %2089 = vrot.lane.b32.xlu0 %v1937, 32
        %v2090 = vpop.permute.xlu0 %2089
        %2107 = vrot.lane.b32.xlu0 %v1938, 40
        %v2108 = vpop.permute.xlu0 %2107
        %2109 = vrot.lane.b32.xlu0 %v1939, 40
        %v2110 = vpop.permute.xlu0 %2109
        %2111 = vrot.lane.b32.xlu0 %v1940, 40
        %v2112 = vpop.permute.xlu0 %2111
        %2113 = vrot.lane.b32.xlu0 %v1941, 40
        %v2114 = vpop.permute.xlu0 %2113
        %2115 = vrot.lane.b32.xlu0 %v1942, 40
        %v2116 = vpop.permute.xlu0 %2115
        %2117 = vrot.lane.b32.xlu0 %v1943, 40
        %v2118 = vpop.permute.xlu0 %2117
        %2119 = vrot.lane.b32.xlu0 %v1944, 40
        %v2120 = vpop.permute.xlu0 %2119
        %2121 = vrot.lane.b32.xlu0 %v1945, 40
        %v2122 = vpop.permute.xlu0 %2121
        %2139 = vrot.lane.b32.xlu0 %v1947, 48
        %v2140 = vpop.permute.xlu0 %2139
        %2141 = vrot.lane.b32.xlu0 %v1948, 48
        %v2142 = vpop.permute.xlu0 %2141
        %2143 = vrot.lane.b32.xlu0 %v1949, 48
        %v2144 = vpop.permute.xlu0 %2143
        %2145 = vrot.lane.b32.xlu0 %v1950, 48
        %v2146 = vpop.permute.xlu0 %2145
        %2147 = vrot.lane.b32.xlu0 %v1951, 48
        %v2148 = vpop.permute.xlu0 %2147
        %2149 = vrot.lane.b32.xlu0 %v1952, 48
        %v2150 = vpop.permute.xlu0 %2149
        %2151 = vrot.lane.b32.xlu0 %v1953, 48
        %v2152 = vpop.permute.xlu0 %2151
        %2153 = vrot.lane.b32.xlu0 %v1954, 48
        %v2154 = vpop.permute.xlu0 %2153
        %2171 = vrot.lane.b32.xlu0 %v1955, 56
        %v2172 = vpop.permute.xlu0 %2171
        %2173 = vrot.lane.b32.xlu0 %v1956, 56
        %v2174 = vpop.permute.xlu0 %2173
        %2175 = vrot.lane.b32.xlu0 %v1957, 56
        %v2176 = vpop.permute.xlu0 %2175
        %2177 = vrot.lane.b32.xlu0 %v1958, 56
        %v2178 = vpop.permute.xlu0 %2177
        %2179 = vrot.lane.b32.xlu0 %v1959, 56
        %v2180 = vpop.permute.xlu0 %2179
        %2181 = vrot.lane.b32.xlu0 %v1960, 56
        %v2182 = vpop.permute.xlu0 %2181
        %2183 = vrot.lane.b32.xlu0 %v1961, 56
        %v2184 = vpop.permute.xlu0 %2183
        %2185 = vrot.lane.b32.xlu0 %v1962, 56
        %v2186 = vpop.permute.xlu0 %2185
        %2203 = vrot.lane.b32.xlu0 %v1963, 64
        %v2204 = vpop.permute.xlu0 %2203
        %2205 = vrot.lane.b32.xlu0 %v1964, 64
        %v2206 = vpop.permute.xlu0 %2205
        %2207 = vrot.lane.b32.xlu0 %v1965, 64
        %v2208 = vpop.permute.xlu0 %2207
        %2209 = vrot.lane.b32.xlu0 %v1966, 64
        %v2210 = vpop.permute.xlu0 %2209
        %2211 = vrot.lane.b32.xlu0 %v1967, 64
        %v2212 = vpop.permute.xlu0 %2211
        %2213 = vrot.lane.b32.xlu0 %v1968, 64
        %v2214 = vpop.permute.xlu0 %2213
        %2215 = vrot.lane.b32.xlu0 %v1969, 64
        %v2216 = vpop.permute.xlu0 %2215
        %2217 = vrot.lane.b32.xlu0 %v1970, 64
        %v2218 = vpop.permute.xlu0 %2217
        %v2227 = vsel %vm1661, %v1898, %v1980
        %v2228 = vsel %vm1661, %v1899, %v1982
        %v2229 = vsel %vm1661, %v1900, %v1984
        %v2230 = vsel %vm1661, %v1901, %v1986
        %v2231 = vsel %vm1661, %v1902, %v1988
        %v2232 = vsel %vm1661, %v1903, %v1990
        %v2233 = vsel %vm1661, %v1904, %v1992
        %v2234 = vsel %vm1661, %v1905, %v1994
        %v2235 = vsel %vm1679, %v2227, %v2012
        %v2236 = vsel %vm1679, %v2228, %v2014
        %v2237 = vsel %vm1679, %v2229, %v2016
        %v2238 = vsel %vm1679, %v2230, %v2018
        %v2239 = vsel %vm1679, %v2231, %v2020
        %v2240 = vsel %vm1679, %v2232, %v2022
        %v2241 = vsel %vm1679, %v2233, %v2024
        %v2242 = vsel %vm1679, %v2234, %v2026
        %v2243 = vsel %vm1697, %v2235, %v2044
        %v2244 = vsel %vm1697, %v2236, %v2046
        %v2245 = vsel %vm1697, %v2237, %v2048
        %v2246 = vsel %vm1697, %v2238, %v2050
        %v2247 = vsel %vm1697, %v2239, %v2052
        %v2248 = vsel %vm1697, %v2240, %v2054
        %v2249 = vsel %vm1697, %v2241, %v2056
        %v2250 = vsel %vm1697, %v2242, %v2058
        %v2251 = vsel %vm1715, %v2243, %v2076
        %v2252 = vsel %vm1715, %v2244, %v2078
        %v2253 = vsel %vm1715, %v2245, %v2080
        %v2254 = vsel %vm1715, %v2246, %v2082
        %v2255 = vsel %vm1715, %v2247, %v2084
        %v2256 = vsel %vm1715, %v2248, %v2086
        %v2257 = vsel %vm1715, %v2249, %v2088
        %v2258 = vsel %vm1715, %v2250, %v2090
        %vm2259 = vcmask 326656
        %v2260 = vsel %vm2259, %v2251, %v2108
        %v2261 = vsel %vm2259, %v2252, %v2110
        %v2262 = vsel %vm2259, %v2253, %v2112
        %v2263 = vsel %vm2259, %v2254, %v2114
        %v2264 = vsel %vm2259, %v2255, %v2116
        %v2265 = vsel %vm2259, %v2256, %v2118
        %v2266 = vsel %vm2259, %v2257, %v2120
        %v2267 = vsel %vm2259, %v2258, %v2122
        %vm2268 = vcmask 392192
        %v2269 = vsel %vm2268, %v2260, %v2140
        %v2270 = vsel %vm2268, %v2261, %v2142
        %v2271 = vsel %vm2268, %v2262, %v2144
        %v2272 = vsel %vm2268, %v2263, %v2146
        %v2273 = vsel %vm2268, %v2264, %v2148
        %v2274 = vsel %vm2268, %v2265, %v2150
        %v2275 = vsel %vm2268, %v2266, %v2152
        %v2276 = vsel %vm2268, %v2267, %v2154
        %vm2277 = vcmask 457728
        %v2278 = vsel %vm2277, %v2269, %v2172
        %v2279 = vsel %vm2277, %v2270, %v2174
        %v2280 = vsel %vm2277, %v2271, %v2176
        %v2281 = vsel %vm2277, %v2272, %v2178
        %v2282 = vsel %vm2277, %v2273, %v2180
        %v2283 = vsel %vm2277, %v2274, %v2182
        %v2284 = vsel %vm2277, %v2275, %v2184
        %v2285 = vsel %vm2277, %v2276, %v2186
        %vm2286 = vcmask 523264
        %v2287 = vsel %vm2286, %v2278, %v2204
        %v2288 = vsel %vm2286, %v2279, %v2206
        %v2289 = vsel %vm2286, %v2280, %v2208
        %v2290 = vsel %vm2286, %v2281, %v2210
        %v2291 = vsel %vm2286, %v2282, %v2212
        %v2292 = vsel %vm2286, %v2283, %v2214
        %v2293 = vsel %vm2286, %v2284, %v2216
        %v2294 = vsel %vm2286, %v2285, %v2218
        %v2295 = vpack.c.bf16 %v2288, %v2287
        %v2296 = vpack.c.bf16 %v2290, %v2289
        %v2297 = vpack.c.bf16 %v2292, %v2291
        %v2298 = vpack.c.bf16 %v2294, %v2293
        %v2299 = vld [vmem:[%s4] sm:$0xf]
        %v2300 = vld [vmem:[%s4 + $0x4] sm:$0xf]
        %v2301 = vld [vmem:[%s4 + $0x8] sm:$0xf]
        %v2302 = vld [vmem:[%s4 + $0xc] sm:$0xf]
        %v2303 = vld [vmem:[%s4 + $0x10] sm:$0xf]
        %v2304 = vld [vmem:[%s4 + $0x14] sm:$0xf]
        %v2305 = vld [vmem:[%s4 + $0x18] sm:$0xf]
        %v2306 = vld [vmem:[%s4 + $0x1c] sm:$0xf]
        %v2307 = vld [vmem:[%s4 + $0x20] sm:$0xf]
        %v2317 = vunpack.c.l.b16 %v2299
        %v2318 = vunpack.c.l.b16 %v2300
        %v2319 = vunpack.c.l.b16 %v2301
        %v2320 = vunpack.c.l.b16 %v2302
        %v2321 = vunpack.c.l.b16 %v2303
        %v2322 = vunpack.c.l.b16 %v2304
        %v2323 = vunpack.c.l.b16 %v2305
        %v2324 = vunpack.c.l.b16 %v2306
        %v2325 = vunpack.c.l.b16 %v2307
        %v2326 = vpack.c.b16 %v2318, %v2317
        %v2327 = vpack.c.b16 %v2320, %v2319
        %v2328 = vpack.c.b16 %v2322, %v2321
        %v2329 = vpack.c.b16 %v2324, %v2323
        %v2330 = vpack.c.b16 %v2325, %v2325
        %vm2335 = vcmask 588800
        %v2337 = vsel %vm2335, %v2295, 0
        %v2340 = vsel %vm2335, %v2296, 0
        %v2343 = vsel %vm2335, %v2297, 0
        %v2346 = vsel %vm2335, %v2298, 0
        %vm2348 = vcmask 1043456
        %v2350 = vsel %vm2348, %v2330, 0
        %2352 = vmatprep.subr.bf16.mxu0 0
        %2353 = vmatpush1.bf16.msra.mxu0 %v2326
        %2354 = vmatprep.subr.bf16.mxu0 0
        %2355 = vmatpush1.bf16.msra.mxu0 %v2327
        %2356 = vmatprep.subr.bf16.mxu0 0
        %2357 = vmatpush1.bf16.msra.mxu0 %v2328
        %2358 = vmatprep.subr.bf16.mxu0 0
        %2359 = vmatpush1.bf16.msra.mxu0 %v2329
        %2360 = vmatprep.subr.bf16.mxu0 0
        %2361 = vmatpush1.bf16.msra.mxu0 %v2350
        %2362 = vmatprep.subr.bf16.mxu0 0
        %2363 = vmatpush1.bf16.msra.mxu0 0
        %2364 = vmatprep.subr.bf16.mxu0 0
        %2365 = vmatpush1.bf16.msra.mxu0 0
        %2366 = vmatprep.subr.bf16.mxu0 0
        %2367 = vmatpush1.bf16.msra.mxu0 0
        %2368 = vmatprep.subr.bf16.mxu0 0
        %2369 = vmatpush1.bf16.msra.mxu0 0
        %2370 = vmatprep.subr.bf16.mxu0 0
        %2371 = vmatpush1.bf16.msra.mxu0 0
        %2372 = vmatprep.subr.bf16.mxu0 0
        %2373 = vmatpush1.bf16.msra.mxu0 0
        %2374 = vmatprep.subr.bf16.mxu0 0
        %2375 = vmatpush1.bf16.msra.mxu0 0
        %2376 = vmatprep.subr.bf16.mxu0 0
        %2377 = vmatpush1.bf16.msra.mxu0 0
        %2378 = vmatprep.subr.bf16.mxu0 0
        %2379 = vmatpush1.bf16.msra.mxu0 0
        %2380 = vmatprep.subr.bf16.mxu0 0
        %2381 = vmatpush1.bf16.msra.mxu0 0
        %2382 = vmatprep.subr.bf16.mxu0 0
        %2383 = vmatpush1.bf16.msra.mxu0 0
        %2384 = vmatprep.mubr.bf16.mxu0 0
        %2385 = vmatmul.mubr.bf16.gmra.mrb[0].mxu0 %v2337
        %v2386 = vpop.f32.mrb[0].mxu0
        %v2387 = vadd.f32 0.0, %v2386
        %v2388 = vpop.f32.mrb[0].mxu0
        %v2389 = vpop.f32.mrb[0].mxu0
        %v2390 = vadd.f32 0.0, %v2389
        %v2391 = vpop.f32.mrb[0].mxu0
        %2392 = vmatprep.mubr.bf16.mxu0 0
        %2393 = vmatmul.mubr.bf16.gmra.mrb[0].mxu0 %v2340
        %v2394 = vpop.f32.mrb[0].mxu0
        %v2395 = vadd.f32 0.0, %v2394
        %v2396 = vpop.f32.mrb[0].mxu0
        %v2397 = vpop.f32.mrb[0].mxu0
        %v2398 = vadd.f32 0.0, %v2397
        %v2399 = vpop.f32.mrb[0].mxu0
        %2400 = vmatprep.mubr.bf16.mxu0 0
        %2401 = vmatmul.mubr.bf16.gmra.mrb[0].mxu0 %v2343
        %v2402 = vpop.f32.mrb[0].mxu0
        %v2403 = vadd.f32 0.0, %v2402
        %v2404 = vpop.f32.mrb[0].mxu0
        %v2405 = vpop.f32.mrb[0].mxu0
        %v2406 = vadd.f32 0.0, %v2405
        %v2407 = vpop.f32.mrb[0].mxu0
        %2408 = vmatprep.mubr.bf16.mxu0 0
        %2409 = vmatmul.mubr.bf16.gmra.mrb[0].mxu0 %v2346
        %v2410 = vpop.f32.mrb[0].mxu0
        %v2411 = vadd.f32 0.0, %v2410
        %v2412 = vpop.f32.mrb[0].mxu0
        %v2413 = vpop.f32.mrb[0].mxu0
        %v2414 = vadd.f32 0.0, %v2413
        %v2415 = vpop.f32.mrb[0].mxu0
        %2416 = vdwg.mxu0
        %v2417 = vld [vmem:[%s5] sm:$0x1]
        %v2419 = vlaneseq
        %v2420 = vshrl.u32 %v2419, 7
        %v2421 = vsub.s32 0, %v2420
        %v2422 = vrot.slane %v2417, %v2421
        %v2424 = vmul.f32 %v2387, %v2422
        %v2425 = vmul.f32 %v2390, %v2422
        %v2426 = vmul.f32 %v2395, %v2422
        %v2427 = vmul.f32 %v2398, %v2422
        %v2428 = vmul.f32 %v2403, %v2422
        %v2429 = vmul.f32 %v2406, %v2422
        %v2430 = vmul.f32 %v2411, %v2422
        %v2431 = vmul.f32 %v2414, %v2422
        %v2432 = vld [vmem:[%s6] sm:$0x1]
        %v2434 = vlaneseq
        %v2435 = vshrl.u32 %v2434, 7
        %v2436 = vsub.s32 0, %v2435
        %v2437 = vrot.slane %v2432, %v2436
        %v2439 = vadd.f32 %v2424, %v2437
        %v2440 = vadd.f32 %v2425, %v2437
        %v2441 = vadd.f32 %v2426, %v2437
        %v2442 = vadd.f32 %v2427, %v2437
        %v2443 = vadd.f32 %v2428, %v2437
        %v2444 = vadd.f32 %v2429, %v2437
        %v2445 = vadd.f32 %v2430, %v2437
        %v2446 = vadd.f32 %v2431, %v2437
        %v2447 = vmax.f32 %v2439, 0.0
        %v2448 = vmax.f32 %v2440, 0.0
        %v2449 = vmax.f32 %v2441, 0.0
        %v2450 = vmax.f32 %v2442, 0.0
        %v2451 = vmax.f32 %v2443, 0.0
        %v2452 = vmax.f32 %v2444, 0.0
        %v2453 = vmax.f32 %v2445, 0.0
        %v2454 = vmax.f32 %v2446, 0.0
        %2455 = vst.msk [vmem:[%s271] sm:$0xff] %vm1661, %v2447
        %2456 = vst.msk [vmem:[%s271 + $0x8] sm:$0xff] %vm1661, %v2448
        %2457 = vst.msk [vmem:[%s271 + $0x10] sm:$0xff] %vm1661, %v2449
        %2458 = vst.msk [vmem:[%s271 + $0x18] sm:$0xff] %vm1661, %v2450
        %2459 = vst.msk [vmem:[%s271 + $0x20] sm:$0xff] %vm1661, %v2451
        %2460 = vst.msk [vmem:[%s271 + $0x28] sm:$0xff] %vm1661, %v2452
        %2461 = vst.msk [vmem:[%s271 + $0x30] sm:$0xff] %vm1661, %v2453
        %2462 = vst.msk [vmem:[%s271 + $0x38] sm:$0xff] %vm1661, %v2454
        %s2463 = sand.u32 %s181, 1
        %s2464 = scalar_lea.sflag [#allocation5], %s2463
        %s2465 = sand.u32 %s181, 1
        %s2466 = smul.addr %s2465, 64
        %s2467 = scalar_lea.vmem [#allocation4], %s2466
        // Predicated region
        $region49: #{tpu_custom_call.1} parent=47 // pred_check
          %p2468 = pneg %p191
        $region50: #{tpu_custom_call.1} parent=47 // pred_check_branch
          %2470 = sbr.rel (%p2468) target = $region52
        $region51: #{tpu_custom_call.1} parent=47 // pred_region
          %s2472 = ssub.s32 1024, 1024
          %2473 = vsyncadd %s2464, %s2472
          %s2474 = smul.addr %s21, 8
          %s2475 = smul.addr %s2474, 128
          %s2476 = scalar_lea.hbm %s7, %s2475
          %s2477 = sshll.u32 %s2467, 4
          %s2478 = int_to_ptr.vmem [resolvable:$true] %s2477
          %2483 = dma.vmem_to_hbm [thread:$0]  %s2478, 1024, %s2476, %s2464, 128, 128, 8
        $region52: #{tpu_custom_call.1} parent=47 // pred_fallthru
          _
      $region48: #{tpu_custom_call.1} parent=5 // pred_fallthru
        _
      %p2484 = scmp.le.s32.totalorder 2, %s16
      // Predicated region
      $region53: #{tpu_custom_call.1} parent=5 // pred_check
        %p2485 = pneg %p2484
      $region54: #{tpu_custom_call.1} parent=5 // pred_check_branch
        %2487 = sbr.rel (%p2485) target = $region56
      $region55: #{tpu_custom_call.1} parent=5 // pred_region
        %s2488 = ssub.s32 %s16, 2
        // Predicated region
        $region57: #{tpu_custom_call.1} parent=55 // pred_check
          %p2489 = pneg %p197
        $region58: #{tpu_custom_call.1} parent=55 // pred_check_branch
          %2491 = sbr.rel (%p2489) target = $region60
        $region59: #{tpu_custom_call.1} parent=55 // pred_region
          %s2492 = sand.u32 %s182, 1
          %s2493 = scalar_lea.sflag [#allocation5], %s2492
          %s2494 = sand.u32 %s182, 1
          %s2495 = smul.addr %s2494, 64
          %s2496 = scalar_lea.vmem [#allocation4], %s2495
          %2497 = dma.done %s2493, 1024
        $region60: #{tpu_custom_call.1} parent=55 // pred_fallthru
          _
      $region56: #{tpu_custom_call.1} parent=5 // pred_fallthru
        _
    $region6: #{tpu_custom_call.1} parent=1 // loop_footer
      %s20 = sadd.s32 1, %s16
    $region7: #{tpu_custom_call.1} parent=1 // loop_footer_branch
      %15 = sbr.rel target = $region3
    $region8: #{tpu_custom_call.1} parent=1 // loop_exit
      _
    %2498 = vsyncpa [#allocation5], 1
    %s2499 = scalar_lea.sflag [#allocation5], 1
    %2500 = vsyncpa %s2499, 1

</llo_original>
